<compile_context>
chip_gen: v7x
topology: tpu7x:2x2x1
jax: 0.10.0
libtpu: 0.0.40
codegen_flags: <defaults>
</compile_context>

<pallas_src>
import functools

import jax
import jax.numpy as jnp
from jax.experimental import pallas as pl
from jax.experimental.pallas import tpu as pltpu


# ---------------------------------------------------------------------------
# Kernel
# ---------------------------------------------------------------------------
def _matching_kernel(vis_ref, lang_ref,
                     vw1_ref, vb1_ref, vw2_ref, vb2_ref,
                     lw1_ref, lb1_ref, lw2_ref, lb2_ref,
                     out_ref):
    def mm(x, w):
        # Deliberate MXU precision: full fp32 contraction for f32 operands (matches the
        # PyTorch f32 reference); bf16 operands take the native single-pass MXU path.
        if x.dtype == jnp.float32:
            return jnp.dot(x, w, preferred_element_type=jnp.float32,
                           precision=jax.lax.Precision.HIGHEST)
        return jnp.dot(x, w, preferred_element_type=jnp.float32)

    def branch(x, w1, b1, w2, b2):
        h = mm(x, w1) + b1                  # Linear1 + folded BN1 (f32 accumulate)
        h = jnp.maximum(h, 0.0)             # ReLU (Dropout = identity in eval mode)
        h = h.astype(w2.dtype)              # recast for the 2nd MXU pass (no-op for f32)
        return mm(h, w2) + b2               # Linear2 + folded BN2

    v_emb = branch(vis_ref[...], vw1_ref[...], vb1_ref[...], vw2_ref[...], vb2_ref[...])
    l_emb = branch(lang_ref[...], lw1_ref[...], lb1_ref[...], lw2_ref[...], lb2_ref[...])

    # Cosine similarity via dot-then-rsqrt == normalize-then-dot with F.normalize's
    # max(||x||, 1e-12) clamp (1e-24 == (1e-12)^2).  rsqrt runs on the EUP slot.
    dvl = jnp.sum(v_emb * l_emb, axis=1, keepdims=True)
    dvv = jnp.sum(v_emb * v_emb, axis=1, keepdims=True)
    dll = jnp.sum(l_emb * l_emb, axis=1, keepdims=True)
    eps2 = 1e-24
    out_ref[...] = (dvl
                    * jax.lax.rsqrt(jnp.maximum(dvv, eps2))
                    * jax.lax.rsqrt(jnp.maximum(dll, eps2)))


# ---------------------------------------------------------------------------
# Wrapper helpers
# ---------------------------------------------------------------------------
def _round_up(x, m):
    return ((x + m - 1) // m) * m


def _fold_bn(gamma, beta, running_mean, running_var, eps=1e-5):
    scale = gamma / jnp.sqrt(running_var + eps)
    shift = beta - running_mean * scale
    return scale.reshape(1, -1), shift.reshape(1, -1)


def _fold_pad_cast(w, b, bn, in_pad, out_pad, w_dtype):
    """Fold inference BatchNorm into the Linear layer, zero-pad to (in_pad, out_pad),
    cast the weight to the MXU compute dtype (bias stays f32 for the accumulate)."""
    scale, shift = _fold_bn(*bn)                           # (1, out_dim)
    in_dim, out_dim = w.shape
    w_f = (w * scale).astype(jnp.float32)
    b_f = (b.reshape(1, -1) * scale + shift).astype(jnp.float32)
    w_f = jnp.pad(w_f, ((0, in_pad - in_dim), (0, out_pad - out_dim)))
    b_f = jnp.pad(b_f, ((0, 0), (0, out_pad - out_dim)))
    return w_f.astype(w_dtype), b_f


def _vmem_budget_bytes():
    """~70% of physical VMEM, capped at 100 MiB: ~45 MiB on 64 MiB parts (v7x),
    ~90 MiB on 128 MiB parts (v5e/v6e)."""
    try:
        phys = int(pltpu.get_tpu_info().vmem_capacity_bytes)
        if phys <= 0:
            raise ValueError("bad vmem size")
    except Exception:
        phys = 64 * 1024 * 1024            # conservative fallback (smallest current part)
    return min(int(phys * 0.70), 100 * 1024 * 1024)


def _choose_tile_n(n, vis_p, lang_p, jemb_p, in_itemsize, weight_bytes, vmem_budget):
    """Derive the batch tile from the VMEM budget and actual operand sizes."""
    # Conservative per-row cost: double-buffered input tiles + f32 temporaries
    # (h / v_emb / l_emb) + output.  Weights budgeted double-buffered for headroom even
    # though we request single buffering.
    per_row = 2 * in_itemsize * (vis_p + lang_p) + 4 * 4 * jemb_p + 8
    avail = vmem_budget - 2 * weight_bytes
    cap = max(avail // per_row, 16)

    if n <= 128:                                     # tiny batch: one small, aligned tile
        return int(_round_up(max(n, 8), 16))

    tile = min(2048, max((cap // 128) * 128, 128), _round_up(n, 128))
    # Ensure >= 2 grid steps so both TensorCores get work on multi-core parts (v7x).
    if _round_up(n, 128) // tile < 2:
        tile = max(128, ((_round_up(n, 128) // 2) // 128) * 128)
    return int(tile)


# ---------------------------------------------------------------------------
# Forward wrapper
# ---------------------------------------------------------------------------
@functools.partial(jax.jit, static_argnames=("use_bf16",))
def matching_forward(visual_input, lang_input, params, *, use_bf16=False):
    n, vis_dim = visual_input.shape
    lang_dim = lang_input.shape[1]
    jemb_dim = params["vis_w1"].shape[1]

    in_dtype = jnp.bfloat16 if use_bf16 else jnp.float32
    in_itemsize = 2 if use_bf16 else 4

    # --- pad feature dims to lane multiples (full MXU / vreg utilization) ---
    vis_p = _round_up(vis_dim, 128)
    lang_p = _round_up(lang_dim, 128)
    jemb_p = _round_up(jemb_dim, 128)

    # --- fold BN into the Linears, zero-pad, cast weights to the compute dtype ---
    vw1, vb1 = _fold_pad_cast(params["vis_w1"], params["vis_b1"], params["vis_bn1"],
                              vis_p, jemb_p, in_dtype)
    vw2, vb2 = _fold_pad_cast(params["vis_w2"], params["vis_b2"], params["vis_bn2"],
                              jemb_p, jemb_p, in_dtype)
    lw1, lb1 = _fold_pad_cast(params["lang_w1"], params["lang_b1"], params["lang_bn1"],
                              lang_p, jemb_p, in_dtype)
    lw2, lb2 = _fold_pad_cast(params["lang_w2"], params["lang_b2"], params["lang_bn2"],
                              jemb_p, jemb_p, in_dtype)
    weights = (vw1, vb1, vw2, vb2, lw1, lb1, lw2, lb2)
    weight_bytes = sum(int(a.size) * a.dtype.itemsize for a in weights)

    # --- generation-aware tiling / VMEM budget ---
    vmem_budget = _vmem_budget_bytes()
    tile_n = _choose_tile_n(n, vis_p, lang_p, jemb_p, in_itemsize, weight_bytes, vmem_budget)
    n_pad = _round_up(n, tile_n)

    vis = jnp.pad(visual_input, ((0, n_pad - n), (0, vis_p - vis_dim))).astype(in_dtype)
    lang = jnp.pad(lang_input, ((0, n_pad - n), (0, lang_p - lang_dim))).astype(in_dtype)

    grid = (n_pad // tile_n,)

    def batch_spec(dim):
        return pl.BlockSpec((tile_n, dim), lambda i: (i, 0))

    def resident_spec(arr):
        # Block index never changes -> DMA once, keep VMEM-resident, single-buffered.
        try:
            return pl.BlockSpec(arr.shape, lambda i: (0, 0), pipeline_mode=pl.Buffered(1))
        except Exception:   # fallback if this jax version lacks pipeline_mode / Buffered
            return pl.BlockSpec(arr.shape, lambda i: (0, 0))

    in_specs = ([batch_spec(vis_p), batch_spec(lang_p)]
                + [resident_spec(a) for a in weights])
    # NOTE: (tile_n, 1) output block is lane-sparse but carries negligible bytes per step.
    out_specs = pl.BlockSpec((tile_n, 1), lambda i: (i, 0))

    # --- advisory cost estimate for the XLA scheduler ---
    matmul_flops = 2 * n_pad * jemb_p * (vis_p + lang_p + 2 * jemb_p)
    io_bytes = (weight_bytes
                + int(vis.size) * vis.dtype.itemsize
                + int(lang.size) * lang.dtype.itemsize
                + 4 * n_pad)
    cost = pl.CostEstimate(flops=matmul_flops + 8 * n_pad * jemb_p,
                           transcendentals=2 * n_pad,
                           bytes_accessed=int(io_bytes))

    out = pl.pallas_call(
        _matching_kernel,
        out_shape=jax.ShapeDtypeStruct((n_pad, 1), jnp.float32),
        grid=grid,
        in_specs=in_specs,
        out_specs=out_specs,
        compiler_params=pltpu.CompilerParams(
            dimension_semantics=("parallel",),      # megacore sharding on v7x
            vmem_limit_bytes=int(vmem_budget),
        ),
        cost_estimate=cost,
    )(vis, lang, *weights)

    return out[:n]


# ---------------------------------------------------------------------------
# Parameter init + pure-JAX reference
# ---------------------------------------------------------------------------
def _init_params(key, vis_dim, lang_dim, jemb_dim):
    ks = jax.random.split(key, 8)

    def lin(k, in_dim, out_dim):
        kw, kb = jax.random.split(k)
        bound = 1.0 / jnp.sqrt(in_dim)
        w = jax.random.uniform(kw, (in_dim, out_dim), jnp.float32, -bound, bound)
        b = jax.random.uniform(kb, (out_dim,), jnp.float32, -bound, bound)
        return w, b

    def bn(k, dim):
        kg, kb, km, kv = jax.random.split(k, 4)
        gamma = 1.0 + 0.1 * jax.random.normal(kg, (dim,), jnp.float32)
        beta = 0.1 * jax.random.normal(kb, (dim,), jnp.float32)
        mean = 0.1 * jax.random.normal(km, (dim,), jnp.float32)
        var = jnp.abs(1.0 + 0.1 * jax.random.normal(kv, (dim,), jnp.float32))
        return gamma, beta, mean, var

    p = {}
    p["vis_w1"], p["vis_b1"] = lin(ks[0], vis_dim, jemb_dim)
    p["vis_bn1"] = bn(ks[1], jemb_dim)
    p["vis_w2"], p["vis_b2"] = lin(ks[2], jemb_dim, jemb_dim)
    p["vis_bn2"] = bn(ks[3], jemb_dim)
    p["lang_w1"], p["lang_b1"] = lin(ks[4], lang_dim, jemb_dim)
    p["lang_bn1"] = bn(ks[5], jemb_dim)
    p["lang_w2"], p["lang_b2"] = lin(ks[6], jemb_dim, jemb_dim)
    p["lang_bn2"] = bn(ks[7], jemb_dim)
    return p


def _reference_forward(visual_input, lang_input, params):
    def branch(x, w1, b1, bn1, w2, b2, bn2):
        s1, t1 = _fold_bn(*bn1)
        s2, t2 = _fold_bn(*bn2)
        h = x @ w1 + b1
        h = h * s1 + t1
        h = jnp.maximum(h, 0.0)
        h = h @ w2 + b2
        h = h * s2 + t2
        return h

    v = branch(visual_input, params["vis_w1"], params["vis_b1"], params["vis_bn1"],
               params["vis_w2"], params["vis_b2"], params["vis_bn2"])
    l = branch(lang_input, params["lang_w1"], params["lang_b1"], params["lang_bn1"],
               params["lang_w2"], params["lang_b2"], params["lang_bn2"])
    v = v / jnp.maximum(jnp.linalg.norm(v, axis=1, keepdims=True), 1e-12)
    l = l / jnp.maximum(jnp.linalg.norm(l, axis=1, keepdims=True), 1e-12)
    return jnp.sum(v * l, axis=1, keepdims=True)


if __name__ == "__main__":
    n, vis_dim, lang_dim, jemb_dim = 8, 32, 24, 32

    key = jax.random.PRNGKey(0)
    k_vis, k_lang, k_params = jax.random.split(key, 3)
    visual_input = jax.random.normal(k_vis, (n, vis_dim), jnp.float32)
    lang_input = jax.random.normal(k_lang, (n, lang_dim), jnp.float32)
    params = _init_params(k_params, vis_dim, lang_dim, jemb_dim)

    ref = _reference_forward(visual_input, lang_input, params)

    # f32 path (explicit HIGHEST MXU precision) -- must match the f32 reference tightly.
    cossim = jax.block_until_ready(matching_forward(visual_input, lang_input, params))
    assert cossim.shape == (n, 1)
    assert jnp.allclose(cossim, ref, atol=1e-5, rtol=1e-5)

    # bf16 MXU path (performance configuration) -- looser tolerance from bf16 rounding.
    cossim_bf16 = jax.block_until_ready(
        matching_forward(visual_input, lang_input, params, use_bf16=True))
    assert cossim_bf16.shape == (n, 1)
    assert jnp.allclose(cossim_bf16, ref, atol=3e-2, rtol=3e-2)

    print("KERNEL_OK")
</pallas_src>

<mosaic_0001>
module attributes {stable_mosaic.version = 11 : i64} {
  func.func @_matching_kernel(%arg0: i32, %arg1: memref<16x128xf32, #tpu.memory_space<vmem>>, %arg2: memref<16x128xf32, #tpu.memory_space<vmem>>, %arg3: memref<128x128xf32, #tpu.memory_space<vmem>>, %arg4: memref<1x128xf32, #tpu.memory_space<vmem>>, %arg5: memref<128x128xf32, #tpu.memory_space<vmem>>, %arg6: memref<1x128xf32, #tpu.memory_space<vmem>>, %arg7: memref<128x128xf32, #tpu.memory_space<vmem>>, %arg8: memref<1x128xf32, #tpu.memory_space<vmem>>, %arg9: memref<128x128xf32, #tpu.memory_space<vmem>>, %arg10: memref<1x128xf32, #tpu.memory_space<vmem>>, %arg11: memref<16x1xf32, #tpu.memory_space<vmem>>) attributes {dimension_semantics = [#tpu.dimension_semantics<parallel>], iteration_bounds = array<i64: 1>, scalar_prefetch = 0 : i64, scratch_operands = 0 : i64, tpu.core_type = #tpu.core_type<tc>, window_params = [{transform_indices = @transform_0, window_bounds = array<i64: 16, 128>}, {transform_indices = @transform_1, window_bounds = array<i64: 16, 128>}, {pipeline_mode = #tpu.pipeline_mode<synchronous>, transform_indices = @transform_2, window_bounds = array<i64: 128, 128>}, {pipeline_mode = #tpu.pipeline_mode<synchronous>, transform_indices = @transform_3, window_bounds = array<i64: 1, 128>}, {pipeline_mode = #tpu.pipeline_mode<synchronous>, transform_indices = @transform_4, window_bounds = array<i64: 128, 128>}, {pipeline_mode = #tpu.pipeline_mode<synchronous>, transform_indices = @transform_5, window_bounds = array<i64: 1, 128>}, {pipeline_mode = #tpu.pipeline_mode<synchronous>, transform_indices = @transform_6, window_bounds = array<i64: 128, 128>}, {pipeline_mode = #tpu.pipeline_mode<synchronous>, transform_indices = @transform_7, window_bounds = array<i64: 1, 128>}, {pipeline_mode = #tpu.pipeline_mode<synchronous>, transform_indices = @transform_8, window_bounds = array<i64: 128, 128>}, {pipeline_mode = #tpu.pipeline_mode<synchronous>, transform_indices = @transform_9, window_bounds = array<i64: 1, 128>}, {transform_indices = @transform_10, window_bounds = array<i64: 16, 1>}]} {
    %c0 = arith.constant 0 : index
    %c0_0 = arith.constant 0 : index
    %0 = vector.load %arg1[%c0, %c0_0] : memref<16x128xf32, #tpu.memory_space<vmem>>, vector<16x128xf32>
    %c0_1 = arith.constant 0 : index
    %c0_2 = arith.constant 0 : index
    %1 = vector.load %arg3[%c0_1, %c0_2] : memref<128x128xf32, #tpu.memory_space<vmem>>, vector<128x128xf32>
    %c0_3 = arith.constant 0 : index
    %c0_4 = arith.constant 0 : index
    %2 = vector.load %arg4[%c0_3, %c0_4] : memref<1x128xf32, #tpu.memory_space<vmem>>, vector<1x128xf32>
    %c0_5 = arith.constant 0 : index
    %c0_6 = arith.constant 0 : index
    %3 = vector.load %arg5[%c0_5, %c0_6] : memref<128x128xf32, #tpu.memory_space<vmem>>, vector<128x128xf32>
    %c0_7 = arith.constant 0 : index
    %c0_8 = arith.constant 0 : index
    %4 = vector.load %arg6[%c0_7, %c0_8] : memref<1x128xf32, #tpu.memory_space<vmem>>, vector<1x128xf32>
    %cst = arith.constant dense<0.000000e+00> : vector<16x128xf32>
    %5 = tpu.matmul %0, %1, %cst {dimension_numbers = #tpu.dot_dimension_numbers<[1], [0], [0], [1], [0, 0, 1, 1], [], []>, precision = #tpu.contract_precision<fp32>} : vector<16x128xf32>, vector<128x128xf32>, vector<16x128xf32> -> vector<16x128xf32>
    %6 = vector.broadcast %2 : vector<1x128xf32> to vector<16x128xf32>
    %7 = arith.addf %5, %6 : vector<16x128xf32>
    %cst_9 = arith.constant 0.000000e+00 : f32
    %8 = vector.broadcast %cst_9 : f32 to vector<16x128xf32>
    %9 = arith.maximumf %7, %8 : vector<16x128xf32>
    %cst_10 = arith.constant dense<0.000000e+00> : vector<16x128xf32>
    %10 = tpu.matmul %9, %3, %cst_10 {dimension_numbers = #tpu.dot_dimension_numbers<[1], [0], [0], [1], [0, 0, 1, 1], [], []>, precision = #tpu.contract_precision<fp32>} : vector<16x128xf32>, vector<128x128xf32>, vector<16x128xf32> -> vector<16x128xf32>
    %11 = vector.broadcast %4 : vector<1x128xf32> to vector<16x128xf32>
    %12 = arith.addf %10, %11 : vector<16x128xf32>
    %c0_11 = arith.constant 0 : index
    %c0_12 = arith.constant 0 : index
    %13 = vector.load %arg2[%c0_11, %c0_12] : memref<16x128xf32, #tpu.memory_space<vmem>>, vector<16x128xf32>
    %c0_13 = arith.constant 0 : index
    %c0_14 = arith.constant 0 : index
    %14 = vector.load %arg7[%c0_13, %c0_14] : memref<128x128xf32, #tpu.memory_space<vmem>>, vector<128x128xf32>
    %c0_15 = arith.constant 0 : index
    %c0_16 = arith.constant 0 : index
    %15 = vector.load %arg8[%c0_15, %c0_16] : memref<1x128xf32, #tpu.memory_space<vmem>>, vector<1x128xf32>
    %c0_17 = arith.constant 0 : index
    %c0_18 = arith.constant 0 : index
    %16 = vector.load %arg9[%c0_17, %c0_18] : memref<128x128xf32, #tpu.memory_space<vmem>>, vector<128x128xf32>
    %c0_19 = arith.constant 0 : index
    %c0_20 = arith.constant 0 : index
    %17 = vector.load %arg10[%c0_19, %c0_20] : memref<1x128xf32, #tpu.memory_space<vmem>>, vector<1x128xf32>
    %cst_21 = arith.constant dense<0.000000e+00> : vector<16x128xf32>
    %18 = tpu.matmul %13, %14, %cst_21 {dimension_numbers = #tpu.dot_dimension_numbers<[1], [0], [0], [1], [0, 0, 1, 1], [], []>, precision = #tpu.contract_precision<fp32>} : vector<16x128xf32>, vector<128x128xf32>, vector<16x128xf32> -> vector<16x128xf32>
    %19 = vector.broadcast %15 : vector<1x128xf32> to vector<16x128xf32>
    %20 = arith.addf %18, %19 : vector<16x128xf32>
    %cst_22 = arith.constant 0.000000e+00 : f32
    %21 = vector.broadcast %cst_22 : f32 to vector<16x128xf32>
    %22 = arith.maximumf %20, %21 : vector<16x128xf32>
    %cst_23 = arith.constant dense<0.000000e+00> : vector<16x128xf32>
    %23 = tpu.matmul %22, %16, %cst_23 {dimension_numbers = #tpu.dot_dimension_numbers<[1], [0], [0], [1], [0, 0, 1, 1], [], []>, precision = #tpu.contract_precision<fp32>} : vector<16x128xf32>, vector<128x128xf32>, vector<16x128xf32> -> vector<16x128xf32>
    %24 = vector.broadcast %17 : vector<1x128xf32> to vector<16x128xf32>
    %25 = arith.addf %23, %24 : vector<16x128xf32>
    %26 = arith.mulf %12, %25 : vector<16x128xf32>
    %cst_24 = arith.constant dense<0.000000e+00> : vector<16xf32>
    %27 = vector.multi_reduction <add>, %26, %cst_24 [1] : vector<16x128xf32> to vector<16xf32>
    %28 = vector.shape_cast %27 : vector<16xf32> to vector<16x1xf32>
    %29 = arith.mulf %12, %12 : vector<16x128xf32>
    %cst_25 = arith.constant dense<0.000000e+00> : vector<16xf32>
    %30 = vector.multi_reduction <add>, %29, %cst_25 [1] : vector<16x128xf32> to vector<16xf32>
    %31 = vector.shape_cast %30 : vector<16xf32> to vector<16x1xf32>
    %32 = arith.mulf %25, %25 : vector<16x128xf32>
    %cst_26 = arith.constant dense<0.000000e+00> : vector<16xf32>
    %33 = vector.multi_reduction <add>, %32, %cst_26 [1] : vector<16x128xf32> to vector<16xf32>
    %34 = vector.shape_cast %33 : vector<16xf32> to vector<16x1xf32>
    %cst_27 = arith.constant 1.000000e-24 : f32
    %35 = vector.broadcast %cst_27 : f32 to vector<16x1xf32>
    %36 = arith.maximumf %31, %35 : vector<16x1xf32>
    %37 = math.rsqrt %36 : vector<16x1xf32>
    %38 = arith.mulf %28, %37 : vector<16x1xf32>
    %cst_28 = arith.constant 1.000000e-24 : f32
    %39 = vector.broadcast %cst_28 : f32 to vector<16x1xf32>
    %40 = arith.maximumf %34, %39 : vector<16x1xf32>
    %41 = math.rsqrt %40 : vector<16x1xf32>
    %42 = arith.mulf %38, %41 : vector<16x1xf32>
    %c0_29 = arith.constant 0 : index
    %c0_30 = arith.constant 0 : index
    %43 = vector.load %arg11[%c0_29, %c0_30] : memref<16x1xf32, #tpu.memory_space<vmem>>, vector<16x1xf32>
    tpu.vector_store %arg11[%c0_29, %c0_30], %42 {strides = array<i32>} : memref<16x1xf32, #tpu.memory_space<vmem>>, vector<16x1xf32>,
    return
  }
  func.func @transform_0(%arg0: i32) -> (i32, i32) {
    %c0_i32 = arith.constant 0 : i32
    %c0_i32_0 = arith.constant 0 : i32
    return %arg0, %c0_i32 : i32, i32
  }
  func.func @transform_1(%arg0: i32) -> (i32, i32) {
    %c0_i32 = arith.constant 0 : i32
    %c0_i32_0 = arith.constant 0 : i32
    return %arg0, %c0_i32 : i32, i32
  }
  func.func @transform_2(%arg0: i32) -> (i32, i32) {
    %c0_i32 = arith.constant 0 : i32
    %c0_i32_0 = arith.constant 0 : i32
    %c0_i32_1 = arith.constant 0 : i32
    return %c0_i32, %c0_i32_0 : i32, i32
  }
  func.func @transform_3(%arg0: i32) -> (i32, i32) {
    %c0_i32 = arith.constant 0 : i32
    %c0_i32_0 = arith.constant 0 : i32
    %c0_i32_1 = arith.constant 0 : i32
    return %c0_i32, %c0_i32_0 : i32, i32
  }
  func.func @transform_4(%arg0: i32) -> (i32, i32) {
    %c0_i32 = arith.constant 0 : i32
    %c0_i32_0 = arith.constant 0 : i32
    %c0_i32_1 = arith.constant 0 : i32
    return %c0_i32, %c0_i32_0 : i32, i32
  }
  func.func @transform_5(%arg0: i32) -> (i32, i32) {
    %c0_i32 = arith.constant 0 : i32
    %c0_i32_0 = arith.constant 0 : i32
    %c0_i32_1 = arith.constant 0 : i32
    return %c0_i32, %c0_i32_0 : i32, i32
  }
  func.func @transform_6(%arg0: i32) -> (i32, i32) {
    %c0_i32 = arith.constant 0 : i32
    %c0_i32_0 = arith.constant 0 : i32
    %c0_i32_1 = arith.constant 0 : i32
    return %c0_i32, %c0_i32_0 : i32, i32
  }
  func.func @transform_7(%arg0: i32) -> (i32, i32) {
    %c0_i32 = arith.constant 0 : i32
    %c0_i32_0 = arith.constant 0 : i32
    %c0_i32_1 = arith.constant 0 : i32
    return %c0_i32, %c0_i32_0 : i32, i32
  }
  func.func @transform_8(%arg0: i32) -> (i32, i32) {
    %c0_i32 = arith.constant 0 : i32
    %c0_i32_0 = arith.constant 0 : i32
    %c0_i32_1 = arith.constant 0 : i32
    return %c0_i32, %c0_i32_0 : i32, i32
  }
  func.func @transform_9(%arg0: i32) -> (i32, i32) {
    %c0_i32 = arith.constant 0 : i32
    %c0_i32_0 = arith.constant 0 : i32
    %c0_i32_1 = arith.constant 0 : i32
    return %c0_i32, %c0_i32_0 : i32, i32
  }
  func.func @transform_10(%arg0: i32) -> (i32, i32) {
    %c0_i32 = arith.constant 0 : i32
    %c0_i32_0 = arith.constant 0 : i32
    return %arg0, %c0_i32 : i32, i32
  }
}

</mosaic_0001>

<llo_original>
// kernel: matching_forward.1
$region0: #{matching_forward.1}
  #allocation0 [shape = 'u32[]', space=smem, size = 0x4, offset = 0x4, fixed_abs, tag = 'smem constant byte address 0x4 - core index']
  #allocation1 [shape = 'u32[144,128]{1,0:T(1,128)}', space=vmem, size = 0x12000, scoped, tag = 'internal scratch']
  %s0 = inlined_call_operand.vmem [shape: f32[16,128], index: 0, kind: input, shape index: {}]
  %s1 = inlined_call_operand.vmem [shape: f32[16,128], index: 1, kind: input, shape index: {}]
  %s2 = inlined_call_operand.vmem [shape: f32[128,128], index: 2, kind: input, shape index: {}]
  %s3 = inlined_call_operand.vmem [shape: f32[1,128], index: 3, kind: input, shape index: {}]
  %s4 = inlined_call_operand.vmem [shape: f32[128,128], index: 4, kind: input, shape index: {}]
  %s5 = inlined_call_operand.vmem [shape: f32[1,128], index: 5, kind: input, shape index: {}]
  %s6 = inlined_call_operand.vmem [shape: f32[128,128], index: 6, kind: input, shape index: {}]
  %s7 = inlined_call_operand.vmem [shape: f32[1,128], index: 7, kind: input, shape index: {}]
  %s8 = inlined_call_operand.vmem [shape: f32[128,128], index: 8, kind: input, shape index: {}]
  %s9 = inlined_call_operand.vmem [shape: f32[1,128], index: 9, kind: input, shape index: {}]
  %s10 = inlined_call_operand.vmem [shape: f32[16,1], index: 10, kind: output, shape index: {}]
  %s11 = sld [smem:[#allocation0]]
  $region50: #{matching_forward.1} parent=0
    _
  %s13 = ssub.s32 1, %s11
  %s14 = scalar_select 0, %s13, %s11
  // Predicated region
  $region2: #{matching_forward.1} parent=0 // pred_check
    _
  $region3: #{matching_forward.1} parent=0 // pred_check_branch
    %16 = sbr.rel (0) target = $region5
  $region4: #{matching_forward.1} parent=0 // pred_region
    _
  $region5: #{matching_forward.1} parent=0 // pred_fallthru
    _
  // Predicated region
  $region6: #{matching_forward.1} parent=0 // pred_check
    _
  $region7: #{matching_forward.1} parent=0 // pred_check_branch
    %18 = sbr.rel (0) target = $region9
  $region8: #{matching_forward.1} parent=0 // pred_region
    _
  $region9: #{matching_forward.1} parent=0 // pred_fallthru
    _
  // Predicated region
  $region10: #{matching_forward.1} parent=0 // pred_check
    _
  $region11: #{matching_forward.1} parent=0 // pred_check_branch
    %20 = sbr.rel (0) target = $region13
  $region12: #{matching_forward.1} parent=0 // pred_region
    _
  $region13: #{matching_forward.1} parent=0 // pred_fallthru
    _
  // Predicated region
  $region14: #{matching_forward.1} parent=0 // pred_check
    _
  $region15: #{matching_forward.1} parent=0 // pred_check_branch
    %22 = sbr.rel (0) target = $region17
  $region16: #{matching_forward.1} parent=0 // pred_region
    _
  $region17: #{matching_forward.1} parent=0 // pred_fallthru
    _
  // Predicated region
  $region18: #{matching_forward.1} parent=0 // pred_check
    _
  $region19: #{matching_forward.1} parent=0 // pred_check_branch
    %24 = sbr.rel (0) target = $region21
  $region20: #{matching_forward.1} parent=0 // pred_region
    _
  $region21: #{matching_forward.1} parent=0 // pred_fallthru
    _
  // Predicated region
  $region22: #{matching_forward.1} parent=0 // pred_check
    _
  $region23: #{matching_forward.1} parent=0 // pred_check_branch
    %26 = sbr.rel (0) target = $region25
  $region24: #{matching_forward.1} parent=0 // pred_region
    _
  $region25: #{matching_forward.1} parent=0 // pred_fallthru
    _
  // Predicated region
  $region26: #{matching_forward.1} parent=0 // pred_check
    _
  $region27: #{matching_forward.1} parent=0 // pred_check_branch
    %28 = sbr.rel (0) target = $region29
  $region28: #{matching_forward.1} parent=0 // pred_region
    _
  $region29: #{matching_forward.1} parent=0 // pred_fallthru
    _
  // Predicated region
  $region30: #{matching_forward.1} parent=0 // pred_check
    _
  $region31: #{matching_forward.1} parent=0 // pred_check_branch
    %30 = sbr.rel (0) target = $region33
  $region32: #{matching_forward.1} parent=0 // pred_region
    _
  $region33: #{matching_forward.1} parent=0 // pred_fallthru
    _
  // Predicated region
  $region34: #{matching_forward.1} parent=0 // pred_check
    _
  $region35: #{matching_forward.1} parent=0 // pred_check_branch
    %32 = sbr.rel (0) target = $region37
  $region36: #{matching_forward.1} parent=0 // pred_region
    _
  $region37: #{matching_forward.1} parent=0 // pred_fallthru
    _
  // Predicated region
  $region38: #{matching_forward.1} parent=0 // pred_check
    _
  $region39: #{matching_forward.1} parent=0 // pred_check_branch
    %34 = sbr.rel (0) target = $region41
  $region40: #{matching_forward.1} parent=0 // pred_region
    _
  $region41: #{matching_forward.1} parent=0 // pred_fallthru
    _
  %v35 = vld [vmem:[%s0] sm:$0xff]
  %v36 = vld [vmem:[%s0 + $0x8] sm:$0xff]
  %v37 = vld [vmem:[%s2] sm:$0xff]
  %v38 = vld [vmem:[%s2 + $0x8] sm:$0xff]
  %v39 = vld [vmem:[%s2 + $0x10] sm:$0xff]
  %v40 = vld [vmem:[%s2 + $0x18] sm:$0xff]
  %v41 = vld [vmem:[%s2 + $0x20] sm:$0xff]
  %v42 = vld [vmem:[%s2 + $0x28] sm:$0xff]
  %v43 = vld [vmem:[%s2 + $0x30] sm:$0xff]
  %v44 = vld [vmem:[%s2 + $0x38] sm:$0xff]
  %v45 = vld [vmem:[%s2 + $0x40] sm:$0xff]
  %v46 = vld [vmem:[%s2 + $0x48] sm:$0xff]
  %v47 = vld [vmem:[%s2 + $0x50] sm:$0xff]
  %v48 = vld [vmem:[%s2 + $0x58] sm:$0xff]
  %v49 = vld [vmem:[%s2 + $0x60] sm:$0xff]
  %v50 = vld [vmem:[%s2 + $0x68] sm:$0xff]
  %v51 = vld [vmem:[%s2 + $0x70] sm:$0xff]
  %v52 = vld [vmem:[%s2 + $0x78] sm:$0xff]
  %v53 = vld [vmem:[%s3] sm:$0x1]
  %v54 = vld [vmem:[%s4] sm:$0xff]
  %v55 = vld [vmem:[%s4 + $0x8] sm:$0xff]
  %v56 = vld [vmem:[%s4 + $0x10] sm:$0xff]
  %v57 = vld [vmem:[%s4 + $0x18] sm:$0xff]
  %v58 = vld [vmem:[%s4 + $0x20] sm:$0xff]
  %v59 = vld [vmem:[%s4 + $0x28] sm:$0xff]
  %v60 = vld [vmem:[%s4 + $0x30] sm:$0xff]
  %v61 = vld [vmem:[%s4 + $0x38] sm:$0xff]
  %v62 = vld [vmem:[%s4 + $0x40] sm:$0xff]
  %v63 = vld [vmem:[%s4 + $0x48] sm:$0xff]
  %v64 = vld [vmem:[%s4 + $0x50] sm:$0xff]
  %v65 = vld [vmem:[%s4 + $0x58] sm:$0xff]
  %v66 = vld [vmem:[%s4 + $0x60] sm:$0xff]
  %v67 = vld [vmem:[%s4 + $0x68] sm:$0xff]
  %v68 = vld [vmem:[%s4 + $0x70] sm:$0xff]
  %v69 = vld [vmem:[%s4 + $0x78] sm:$0xff]
  %v70 = vld [vmem:[%s5] sm:$0x1]
  %v72 = vlaneseq
  %v73 = vshrl.u32 %v72, 7
  %v74 = vsub.s32 0, %v73
  %v75 = vrot.slane %v53, %v74
  %77 = vmatprep.subr.mxu0 0.0
  %v78 = vand.u32 %v37, 4294901760
  %79 = vmatpush1.msra.mxu0 %v78
  %80 = vmatprep.subr.mxu0 0.0
  %v81 = vand.u32 %v38, 4294901760
  %82 = vmatpush1.msra.mxu0 %v81
  %83 = vmatprep.subr.mxu0 0.0
  %v84 = vand.u32 %v39, 4294901760
  %85 = vmatpush1.msra.mxu0 %v84
  %86 = vmatprep.subr.mxu0 0.0
  %v87 = vand.u32 %v40, 4294901760
  %88 = vmatpush1.msra.mxu0 %v87
  %89 = vmatprep.subr.mxu0 0.0
  %v90 = vand.u32 %v41, 4294901760
  %91 = vmatpush1.msra.mxu0 %v90
  %92 = vmatprep.subr.mxu0 0.0
  %v93 = vand.u32 %v42, 4294901760
  %94 = vmatpush1.msra.mxu0 %v93
  %95 = vmatprep.subr.mxu0 0.0
  %v96 = vand.u32 %v43, 4294901760
  %97 = vmatpush1.msra.mxu0 %v96
  %98 = vmatprep.subr.mxu0 0.0
  %v99 = vand.u32 %v44, 4294901760
  %100 = vmatpush1.msra.mxu0 %v99
  %101 = vmatprep.subr.mxu0 0.0
  %v102 = vand.u32 %v45, 4294901760
  %103 = vmatpush1.msra.mxu0 %v102
  %104 = vmatprep.subr.mxu0 0.0
  %v105 = vand.u32 %v46, 4294901760
  %106 = vmatpush1.msra.mxu0 %v105
  %107 = vmatprep.subr.mxu0 0.0
  %v108 = vand.u32 %v47, 4294901760
  %109 = vmatpush1.msra.mxu0 %v108
  %110 = vmatprep.subr.mxu0 0.0
  %v111 = vand.u32 %v48, 4294901760
  %112 = vmatpush1.msra.mxu0 %v111
  %113 = vmatprep.subr.mxu0 0.0
  %v114 = vand.u32 %v49, 4294901760
  %115 = vmatpush1.msra.mxu0 %v114
  %116 = vmatprep.subr.mxu0 0.0
  %v117 = vand.u32 %v50, 4294901760
  %118 = vmatpush1.msra.mxu0 %v117
  %119 = vmatprep.subr.mxu0 0.0
  %v120 = vand.u32 %v51, 4294901760
  %121 = vmatpush1.msra.mxu0 %v120
  %122 = vmatprep.subr.mxu0 0.0
  %v123 = vand.u32 %v52, 4294901760
  %124 = vmatpush1.msra.mxu0 %v123
  %125 = vmatprep.subr.mxu0 0.0
  %126 = vmatpush1.msra.mxu0 0.0
  %127 = vmatprep.subr.mxu0 0.0
  %128 = vmatpush1.msra.mxu0 0.0
  %129 = vmatprep.subr.mxu0 0.0
  %130 = vmatpush1.msra.mxu0 0.0
  %131 = vmatprep.subr.mxu0 0.0
  %132 = vmatpush1.msra.mxu0 0.0
  %133 = vmatprep.subr.mxu0 0.0
  %134 = vmatpush1.msra.mxu0 0.0
  %135 = vmatprep.subr.mxu0 0.0
  %136 = vmatpush1.msra.mxu0 0.0
  %137 = vmatprep.subr.mxu0 0.0
  %138 = vmatpush1.msra.mxu0 0.0
  %139 = vmatprep.subr.mxu0 0.0
  %140 = vmatpush1.msra.mxu0 0.0
  %141 = vmatprep.subr.mxu0 0.0
  %142 = vmatpush1.msra.mxu0 0.0
  %143 = vmatprep.subr.mxu0 0.0
  %144 = vmatpush1.msra.mxu0 0.0
  %145 = vmatprep.subr.mxu0 0.0
  %146 = vmatpush1.msra.mxu0 0.0
  %147 = vmatprep.subr.mxu0 0.0
  %148 = vmatpush1.msra.mxu0 0.0
  %149 = vmatprep.subr.mxu0 0.0
  %150 = vmatpush1.msra.mxu0 0.0
  %151 = vmatprep.subr.mxu0 0.0
  %152 = vmatpush1.msra.mxu0 0.0
  %153 = vmatprep.subr.mxu0 0.0
  %154 = vmatpush1.msra.mxu0 0.0
  %155 = vmatprep.subr.mxu0 0.0
  %156 = vmatpush1.msra.mxu0 0.0
  %157 = vmatprep.mubr.f32.mxu0 0.0
  %v158 = vand.u32 %v35, 4294901760
  %v159 = vsub.f32 %v35, %v158
  %v160 = vand.u32 %v159, 4294901760
  %v161 = vsub.f32 %v159, %v160
  %v162 = vand.u32 %v161, 4294901760
  %163 = vmatmul.mubr.f32.gmra.mrb[0].mxu0 %v162
  %v164 = vpop.f32.mrb[0].mxu0
  %v165 = vadd.f32 %v75, %v164
  %v166 = vpop.f32.mrb[0].mxu0
  %167 = vmatprep.mubr.f32.mxu0 0.0
  %v168 = vand.u32 %v36, 4294901760
  %v169 = vsub.f32 %v36, %v168
  %v170 = vand.u32 %v169, 4294901760
  %v171 = vsub.f32 %v169, %v170
  %v172 = vand.u32 %v171, 4294901760
  %173 = vmatmul.mubr.f32.gmra.mrb[0].mxu0 %v172
  %v174 = vpop.f32.mrb[0].mxu0
  %v175 = vadd.f32 %v75, %v174
  %v176 = vpop.f32.mrb[0].mxu0
  %177 = vdwg.mxu0
  %178 = vmatprep.subr.mxu0 0.0
  %v179 = vand.u32 %v37, 4294901760
  %v180 = vsub.f32 %v37, %v179
  %v181 = vand.u32 %v180, 4294901760
  %v182 = vsub.f32 %v180, %v181
  %v183 = vand.u32 %v182, 4294901760
  %184 = vmatpush1.msra.mxu0 %v183
  %185 = vmatprep.subr.mxu0 0.0
  %v186 = vand.u32 %v38, 4294901760
  %v187 = vsub.f32 %v38, %v186
  %v188 = vand.u32 %v187, 4294901760
  %v189 = vsub.f32 %v187, %v188
  %v190 = vand.u32 %v189, 4294901760
  %191 = vmatpush1.msra.mxu0 %v190
  %192 = vmatprep.subr.mxu0 0.0
  %v193 = vand.u32 %v39, 4294901760
  %v194 = vsub.f32 %v39, %v193
  %v195 = vand.u32 %v194, 4294901760
  %v196 = vsub.f32 %v194, %v195
  %v197 = vand.u32 %v196, 4294901760
  %198 = vmatpush1.msra.mxu0 %v197
  %199 = vmatprep.subr.mxu0 0.0
  %v200 = vand.u32 %v40, 4294901760
  %v201 = vsub.f32 %v40, %v200
  %v202 = vand.u32 %v201, 4294901760
  %v203 = vsub.f32 %v201, %v202
  %v204 = vand.u32 %v203, 4294901760
  %205 = vmatpush1.msra.mxu0 %v204
  %206 = vmatprep.subr.mxu0 0.0
  %v207 = vand.u32 %v41, 4294901760
  %v208 = vsub.f32 %v41, %v207
  %v209 = vand.u32 %v208, 4294901760
  %v210 = vsub.f32 %v208, %v209
  %v211 = vand.u32 %v210, 4294901760
  %212 = vmatpush1.msra.mxu0 %v211
  %213 = vmatprep.subr.mxu0 0.0
  %v214 = vand.u32 %v42, 4294901760
  %v215 = vsub.f32 %v42, %v214
  %v216 = vand.u32 %v215, 4294901760
  %v217 = vsub.f32 %v215, %v216
  %v218 = vand.u32 %v217, 4294901760
  %219 = vmatpush1.msra.mxu0 %v218
  %220 = vmatprep.subr.mxu0 0.0
  %v221 = vand.u32 %v43, 4294901760
  %v222 = vsub.f32 %v43, %v221
  %v223 = vand.u32 %v222, 4294901760
  %v224 = vsub.f32 %v222, %v223
  %v225 = vand.u32 %v224, 4294901760
  %226 = vmatpush1.msra.mxu0 %v225
  %227 = vmatprep.subr.mxu0 0.0
  %v228 = vand.u32 %v44, 4294901760
  %v229 = vsub.f32 %v44, %v228
  %v230 = vand.u32 %v229, 4294901760
  %v231 = vsub.f32 %v229, %v230
  %v232 = vand.u32 %v231, 4294901760
  %233 = vmatpush1.msra.mxu0 %v232
  %234 = vmatprep.subr.mxu0 0.0
  %v235 = vand.u32 %v45, 4294901760
  %v236 = vsub.f32 %v45, %v235
  %v237 = vand.u32 %v236, 4294901760
  %v238 = vsub.f32 %v236, %v237
  %v239 = vand.u32 %v238, 4294901760
  %240 = vmatpush1.msra.mxu0 %v239
  %241 = vmatprep.subr.mxu0 0.0
  %v242 = vand.u32 %v46, 4294901760
  %v243 = vsub.f32 %v46, %v242
  %v244 = vand.u32 %v243, 4294901760
  %v245 = vsub.f32 %v243, %v244
  %v246 = vand.u32 %v245, 4294901760
  %247 = vmatpush1.msra.mxu0 %v246
  %248 = vmatprep.subr.mxu0 0.0
  %v249 = vand.u32 %v47, 4294901760
  %v250 = vsub.f32 %v47, %v249
  %v251 = vand.u32 %v250, 4294901760
  %v252 = vsub.f32 %v250, %v251
  %v253 = vand.u32 %v252, 4294901760
  %254 = vmatpush1.msra.mxu0 %v253
  %255 = vmatprep.subr.mxu0 0.0
  %v256 = vand.u32 %v48, 4294901760
  %v257 = vsub.f32 %v48, %v256
  %v258 = vand.u32 %v257, 4294901760
  %v259 = vsub.f32 %v257, %v258
  %v260 = vand.u32 %v259, 4294901760
  %261 = vmatpush1.msra.mxu0 %v260
  %262 = vmatprep.subr.mxu0 0.0
  %v263 = vand.u32 %v49, 4294901760
  %v264 = vsub.f32 %v49, %v263
  %v265 = vand.u32 %v264, 4294901760
  %v266 = vsub.f32 %v264, %v265
  %v267 = vand.u32 %v266, 4294901760
  %268 = vmatpush1.msra.mxu0 %v267
  %269 = vmatprep.subr.mxu0 0.0
  %v270 = vand.u32 %v50, 4294901760
  %v271 = vsub.f32 %v50, %v270
  %v272 = vand.u32 %v271, 4294901760
  %v273 = vsub.f32 %v271, %v272
  %v274 = vand.u32 %v273, 4294901760
  %275 = vmatpush1.msra.mxu0 %v274
  %276 = vmatprep.subr.mxu0 0.0
  %v277 = vand.u32 %v51, 4294901760
  %v278 = vsub.f32 %v51, %v277
  %v279 = vand.u32 %v278, 4294901760
  %v280 = vsub.f32 %v278, %v279
  %v281 = vand.u32 %v280, 4294901760
  %282 = vmatpush1.msra.mxu0 %v281
  %283 = vmatprep.subr.mxu0 0.0
  %v284 = vand.u32 %v52, 4294901760
  %v285 = vsub.f32 %v52, %v284
  %v286 = vand.u32 %v285, 4294901760
  %v287 = vsub.f32 %v285, %v286
  %v288 = vand.u32 %v287, 4294901760
  %289 = vmatpush1.msra.mxu0 %v288
  %290 = vmatprep.subr.mxu0 0.0
  %291 = vmatpush1.msra.mxu0 0.0
  %292 = vmatprep.subr.mxu0 0.0
  %293 = vmatpush1.msra.mxu0 0.0
  %294 = vmatprep.subr.mxu0 0.0
  %295 = vmatpush1.msra.mxu0 0.0
  %296 = vmatprep.subr.mxu0 0.0
  %297 = vmatpush1.msra.mxu0 0.0
  %298 = vmatprep.subr.mxu0 0.0
  %299 = vmatpush1.msra.mxu0 0.0
  %300 = vmatprep.subr.mxu0 0.0
  %301 = vmatpush1.msra.mxu0 0.0
  %302 = vmatprep.subr.mxu0 0.0
  %303 = vmatpush1.msra.mxu0 0.0
  %304 = vmatprep.subr.mxu0 0.0
  %305 = vmatpush1.msra.mxu0 0.0
  %306 = vmatprep.subr.mxu0 0.0
  %307 = vmatpush1.msra.mxu0 0.0
  %308 = vmatprep.subr.mxu0 0.0
  %309 = vmatpush1.msra.mxu0 0.0
  %310 = vmatprep.subr.mxu0 0.0
  %311 = vmatpush1.msra.mxu0 0.0
  %312 = vmatprep.subr.mxu0 0.0
  %313 = vmatpush1.msra.mxu0 0.0
  %314 = vmatprep.subr.mxu0 0.0
  %315 = vmatpush1.msra.mxu0 0.0
  %316 = vmatprep.subr.mxu0 0.0
  %317 = vmatpush1.msra.mxu0 0.0
  %318 = vmatprep.subr.mxu0 0.0
  %319 = vmatpush1.msra.mxu0 0.0
  %320 = vmatprep.subr.mxu0 0.0
  %321 = vmatpush1.msra.mxu0 0.0
  %322 = vmatprep.mubr.f32.mxu0 0.0
  %v323 = vand.u32 %v35, 4294901760
  %324 = vmatmul.mubr.f32.gmra.mrb[0].mxu0 %v323
  %v325 = vpop.f32.mrb[0].mxu0
  %v326 = vadd.f32 %v165, %v325
  %v327 = vpop.f32.mrb[0].mxu0
  %328 = vmatprep.mubr.f32.mxu0 0.0
  %v329 = vand.u32 %v36, 4294901760
  %330 = vmatmul.mubr.f32.gmra.mrb[0].mxu0 %v329
  %v331 = vpop.f32.mrb[0].mxu0
  %v332 = vadd.f32 %v175, %v331
  %v333 = vpop.f32.mrb[0].mxu0
  %334 = vdwg.mxu0
  %335 = vmatprep.subr.mxu0 0.0
  %v336 = vand.u32 %v37, 4294901760
  %v337 = vsub.f32 %v37, %v336
  %338 = vmatpush1.msra.mxu0 %v337
  %339 = vmatprep.subr.mxu0 0.0
  %v340 = vand.u32 %v38, 4294901760
  %v341 = vsub.f32 %v38, %v340
  %342 = vmatpush1.msra.mxu0 %v341
  %343 = vmatprep.subr.mxu0 0.0
  %v344 = vand.u32 %v39, 4294901760
  %v345 = vsub.f32 %v39, %v344
  %346 = vmatpush1.msra.mxu0 %v345
  %347 = vmatprep.subr.mxu0 0.0
  %v348 = vand.u32 %v40, 4294901760
  %v349 = vsub.f32 %v40, %v348
  %350 = vmatpush1.msra.mxu0 %v349
  %351 = vmatprep.subr.mxu0 0.0
  %v352 = vand.u32 %v41, 4294901760
  %v353 = vsub.f32 %v41, %v352
  %354 = vmatpush1.msra.mxu0 %v353
  %355 = vmatprep.subr.mxu0 0.0
  %v356 = vand.u32 %v42, 4294901760
  %v357 = vsub.f32 %v42, %v356
  %358 = vmatpush1.msra.mxu0 %v357
  %359 = vmatprep.subr.mxu0 0.0
  %v360 = vand.u32 %v43, 4294901760
  %v361 = vsub.f32 %v43, %v360
  %362 = vmatpush1.msra.mxu0 %v361
  %363 = vmatprep.subr.mxu0 0.0
  %v364 = vand.u32 %v44, 4294901760
  %v365 = vsub.f32 %v44, %v364
  %366 = vmatpush1.msra.mxu0 %v365
  %367 = vmatprep.subr.mxu0 0.0
  %v368 = vand.u32 %v45, 4294901760
  %v369 = vsub.f32 %v45, %v368
  %370 = vmatpush1.msra.mxu0 %v369
  %371 = vmatprep.subr.mxu0 0.0
  %v372 = vand.u32 %v46, 4294901760
  %v373 = vsub.f32 %v46, %v372
  %374 = vmatpush1.msra.mxu0 %v373
  %375 = vmatprep.subr.mxu0 0.0
  %v376 = vand.u32 %v47, 4294901760
  %v377 = vsub.f32 %v47, %v376
  %378 = vmatpush1.msra.mxu0 %v377
  %379 = vmatprep.subr.mxu0 0.0
  %v380 = vand.u32 %v48, 4294901760
  %v381 = vsub.f32 %v48, %v380
  %382 = vmatpush1.msra.mxu0 %v381
  %383 = vmatprep.subr.mxu0 0.0
  %v384 = vand.u32 %v49, 4294901760
  %v385 = vsub.f32 %v49, %v384
  %386 = vmatpush1.msra.mxu0 %v385
  %387 = vmatprep.subr.mxu0 0.0
  %v388 = vand.u32 %v50, 4294901760
  %v389 = vsub.f32 %v50, %v388
  %390 = vmatpush1.msra.mxu0 %v389
  %391 = vmatprep.subr.mxu0 0.0
  %v392 = vand.u32 %v51, 4294901760
  %v393 = vsub.f32 %v51, %v392
  %394 = vmatpush1.msra.mxu0 %v393
  %395 = vmatprep.subr.mxu0 0.0
  %v396 = vand.u32 %v52, 4294901760
  %v397 = vsub.f32 %v52, %v396
  %398 = vmatpush1.msra.mxu0 %v397
  %399 = vmatprep.subr.mxu0 0.0
  %400 = vmatpush1.msra.mxu0 0.0
  %401 = vmatprep.subr.mxu0 0.0
  %402 = vmatpush1.msra.mxu0 0.0
  %403 = vmatprep.subr.mxu0 0.0
  %404 = vmatpush1.msra.mxu0 0.0
  %405 = vmatprep.subr.mxu0 0.0
  %406 = vmatpush1.msra.mxu0 0.0
  %407 = vmatprep.subr.mxu0 0.0
  %408 = vmatpush1.msra.mxu0 0.0
  %409 = vmatprep.subr.mxu0 0.0
  %410 = vmatpush1.msra.mxu0 0.0
  %411 = vmatprep.subr.mxu0 0.0
  %412 = vmatpush1.msra.mxu0 0.0
  %413 = vmatprep.subr.mxu0 0.0
  %414 = vmatpush1.msra.mxu0 0.0
  %415 = vmatprep.subr.mxu0 0.0
  %416 = vmatpush1.msra.mxu0 0.0
  %417 = vmatprep.subr.mxu0 0.0
  %418 = vmatpush1.msra.mxu0 0.0
  %419 = vmatprep.subr.mxu0 0.0
  %420 = vmatpush1.msra.mxu0 0.0
  %421 = vmatprep.subr.mxu0 0.0
  %422 = vmatpush1.msra.mxu0 0.0
  %423 = vmatprep.subr.mxu0 0.0
  %424 = vmatpush1.msra.mxu0 0.0
  %425 = vmatprep.subr.mxu0 0.0
  %426 = vmatpush1.msra.mxu0 0.0
  %427 = vmatprep.subr.mxu0 0.0
  %428 = vmatpush1.msra.mxu0 0.0
  %429 = vmatprep.subr.mxu0 0.0
  %430 = vmatpush1.msra.mxu0 0.0
  %431 = vmatprep.mubr.f32.mxu0 0.0
  %v432 = vand.u32 %v35, 4294901760
  %v433 = vsub.f32 %v35, %v432
  %434 = vmatmul.mubr.f32.gmra.mrb[0].mxu0 %v433
  %v435 = vpop.f32.mrb[0].mxu0
  %v436 = vadd.f32 %v326, %v435
  %v437 = vpop.f32.mrb[0].mxu0
  %438 = vmatprep.mubr.f32.mxu0 0.0
  %v439 = vand.u32 %v36, 4294901760
  %v440 = vsub.f32 %v36, %v439
  %441 = vmatmul.mubr.f32.gmra.mrb[0].mxu0 %v440
  %v442 = vpop.f32.mrb[0].mxu0
  %v443 = vadd.f32 %v332, %v442
  %v444 = vpop.f32.mrb[0].mxu0
  %445 = vdwg.mxu0
  %446 = vmatprep.subr.mxu0 0.0
  %v447 = vand.u32 %v37, 4294901760
  %448 = vmatpush1.msra.mxu0 %v447
  %449 = vmatprep.subr.mxu0 0.0
  %v450 = vand.u32 %v38, 4294901760
  %451 = vmatpush1.msra.mxu0 %v450
  %452 = vmatprep.subr.mxu0 0.0
  %v453 = vand.u32 %v39, 4294901760
  %454 = vmatpush1.msra.mxu0 %v453
  %455 = vmatprep.subr.mxu0 0.0
  %v456 = vand.u32 %v40, 4294901760
  %457 = vmatpush1.msra.mxu0 %v456
  %458 = vmatprep.subr.mxu0 0.0
  %v459 = vand.u32 %v41, 4294901760
  %460 = vmatpush1.msra.mxu0 %v459
  %461 = vmatprep.subr.mxu0 0.0
  %v462 = vand.u32 %v42, 4294901760
  %463 = vmatpush1.msra.mxu0 %v462
  %464 = vmatprep.subr.mxu0 0.0
  %v465 = vand.u32 %v43, 4294901760
  %466 = vmatpush1.msra.mxu0 %v465
  %467 = vmatprep.subr.mxu0 0.0
  %v468 = vand.u32 %v44, 4294901760
  %469 = vmatpush1.msra.mxu0 %v468
  %470 = vmatprep.subr.mxu0 0.0
  %v471 = vand.u32 %v45, 4294901760
  %472 = vmatpush1.msra.mxu0 %v471
  %473 = vmatprep.subr.mxu0 0.0
  %v474 = vand.u32 %v46, 4294901760
  %475 = vmatpush1.msra.mxu0 %v474
  %476 = vmatprep.subr.mxu0 0.0
  %v477 = vand.u32 %v47, 4294901760
  %478 = vmatpush1.msra.mxu0 %v477
  %479 = vmatprep.subr.mxu0 0.0
  %v480 = vand.u32 %v48, 4294901760
  %481 = vmatpush1.msra.mxu0 %v480
  %482 = vmatprep.subr.mxu0 0.0
  %v483 = vand.u32 %v49, 4294901760
  %484 = vmatpush1.msra.mxu0 %v483
  %485 = vmatprep.subr.mxu0 0.0
  %v486 = vand.u32 %v50, 4294901760
  %487 = vmatpush1.msra.mxu0 %v486
  %488 = vmatprep.subr.mxu0 0.0
  %v489 = vand.u32 %v51, 4294901760
  %490 = vmatpush1.msra.mxu0 %v489
  %491 = vmatprep.subr.mxu0 0.0
  %v492 = vand.u32 %v52, 4294901760
  %493 = vmatpush1.msra.mxu0 %v492
  %494 = vmatprep.subr.mxu0 0.0
  %495 = vmatpush1.msra.mxu0 0.0
  %496 = vmatprep.subr.mxu0 0.0
  %497 = vmatpush1.msra.mxu0 0.0
  %498 = vmatprep.subr.mxu0 0.0
  %499 = vmatpush1.msra.mxu0 0.0
  %500 = vmatprep.subr.mxu0 0.0
  %501 = vmatpush1.msra.mxu0 0.0
  %502 = vmatprep.subr.mxu0 0.0
  %503 = vmatpush1.msra.mxu0 0.0
  %504 = vmatprep.subr.mxu0 0.0
  %505 = vmatpush1.msra.mxu0 0.0
  %506 = vmatprep.subr.mxu0 0.0
  %507 = vmatpush1.msra.mxu0 0.0
  %508 = vmatprep.subr.mxu0 0.0
  %509 = vmatpush1.msra.mxu0 0.0
  %510 = vmatprep.subr.mxu0 0.0
  %511 = vmatpush1.msra.mxu0 0.0
  %512 = vmatprep.subr.mxu0 0.0
  %513 = vmatpush1.msra.mxu0 0.0
  %514 = vmatprep.subr.mxu0 0.0
  %515 = vmatpush1.msra.mxu0 0.0
  %516 = vmatprep.subr.mxu0 0.0
  %517 = vmatpush1.msra.mxu0 0.0
  %518 = vmatprep.subr.mxu0 0.0
  %519 = vmatpush1.msra.mxu0 0.0
  %520 = vmatprep.subr.mxu0 0.0
  %521 = vmatpush1.msra.mxu0 0.0
  %522 = vmatprep.subr.mxu0 0.0
  %523 = vmatpush1.msra.mxu0 0.0
  %524 = vmatprep.subr.mxu0 0.0
  %525 = vmatpush1.msra.mxu0 0.0
  %526 = vmatprep.mubr.f32.mxu0 0.0
  %v527 = vand.u32 %v35, 4294901760
  %v528 = vsub.f32 %v35, %v527
  %v529 = vand.u32 %v528, 4294901760
  %530 = vmatmul.mubr.f32.gmra.mrb[0].mxu0 %v529
  %v531 = vpop.f32.mrb[0].mxu0
  %v532 = vadd.f32 %v436, %v531
  %v533 = vpop.f32.mrb[0].mxu0
  %534 = vmatprep.mubr.f32.mxu0 0.0
  %v535 = vand.u32 %v36, 4294901760
  %v536 = vsub.f32 %v36, %v535
  %v537 = vand.u32 %v536, 4294901760
  %538 = vmatmul.mubr.f32.gmra.mrb[0].mxu0 %v537
  %v539 = vpop.f32.mrb[0].mxu0
  %v540 = vadd.f32 %v443, %v539
  %v541 = vpop.f32.mrb[0].mxu0
  %542 = vdwg.mxu0
  %543 = vmatprep.subr.mxu0 0.0
  %v544 = vand.u32 %v37, 4294901760
  %v545 = vsub.f32 %v37, %v544
  %v546 = vand.u32 %v545, 4294901760
  %547 = vmatpush1.msra.mxu0 %v546
  %548 = vmatprep.subr.mxu0 0.0
  %v549 = vand.u32 %v38, 4294901760
  %v550 = vsub.f32 %v38, %v549
  %v551 = vand.u32 %v550, 4294901760
  %552 = vmatpush1.msra.mxu0 %v551
  %553 = vmatprep.subr.mxu0 0.0
  %v554 = vand.u32 %v39, 4294901760
  %v555 = vsub.f32 %v39, %v554
  %v556 = vand.u32 %v555, 4294901760
  %557 = vmatpush1.msra.mxu0 %v556
  %558 = vmatprep.subr.mxu0 0.0
  %v559 = vand.u32 %v40, 4294901760
  %v560 = vsub.f32 %v40, %v559
  %v561 = vand.u32 %v560, 4294901760
  %562 = vmatpush1.msra.mxu0 %v561
  %563 = vmatprep.subr.mxu0 0.0
  %v564 = vand.u32 %v41, 4294901760
  %v565 = vsub.f32 %v41, %v564
  %v566 = vand.u32 %v565, 4294901760
  %567 = vmatpush1.msra.mxu0 %v566
  %568 = vmatprep.subr.mxu0 0.0
  %v569 = vand.u32 %v42, 4294901760
  %v570 = vsub.f32 %v42, %v569
  %v571 = vand.u32 %v570, 4294901760
  %572 = vmatpush1.msra.mxu0 %v571
  %573 = vmatprep.subr.mxu0 0.0
  %v574 = vand.u32 %v43, 4294901760
  %v575 = vsub.f32 %v43, %v574
  %v576 = vand.u32 %v575, 4294901760
  %577 = vmatpush1.msra.mxu0 %v576
  %578 = vmatprep.subr.mxu0 0.0
  %v579 = vand.u32 %v44, 4294901760
  %v580 = vsub.f32 %v44, %v579
  %v581 = vand.u32 %v580, 4294901760
  %582 = vmatpush1.msra.mxu0 %v581
  %583 = vmatprep.subr.mxu0 0.0
  %v584 = vand.u32 %v45, 4294901760
  %v585 = vsub.f32 %v45, %v584
  %v586 = vand.u32 %v585, 4294901760
  %587 = vmatpush1.msra.mxu0 %v586
  %588 = vmatprep.subr.mxu0 0.0
  %v589 = vand.u32 %v46, 4294901760
  %v590 = vsub.f32 %v46, %v589
  %v591 = vand.u32 %v590, 4294901760
  %592 = vmatpush1.msra.mxu0 %v591
  %593 = vmatprep.subr.mxu0 0.0
  %v594 = vand.u32 %v47, 4294901760
  %v595 = vsub.f32 %v47, %v594
  %v596 = vand.u32 %v595, 4294901760
  %597 = vmatpush1.msra.mxu0 %v596
  %598 = vmatprep.subr.mxu0 0.0
  %v599 = vand.u32 %v48, 4294901760
  %v600 = vsub.f32 %v48, %v599
  %v601 = vand.u32 %v600, 4294901760
  %602 = vmatpush1.msra.mxu0 %v601
  %603 = vmatprep.subr.mxu0 0.0
  %v604 = vand.u32 %v49, 4294901760
  %v605 = vsub.f32 %v49, %v604
  %v606 = vand.u32 %v605, 4294901760
  %607 = vmatpush1.msra.mxu0 %v606
  %608 = vmatprep.subr.mxu0 0.0
  %v609 = vand.u32 %v50, 4294901760
  %v610 = vsub.f32 %v50, %v609
  %v611 = vand.u32 %v610, 4294901760
  %612 = vmatpush1.msra.mxu0 %v611
  %613 = vmatprep.subr.mxu0 0.0
  %v614 = vand.u32 %v51, 4294901760
  %v615 = vsub.f32 %v51, %v614
  %v616 = vand.u32 %v615, 4294901760
  %617 = vmatpush1.msra.mxu0 %v616
  %618 = vmatprep.subr.mxu0 0.0
  %v619 = vand.u32 %v52, 4294901760
  %v620 = vsub.f32 %v52, %v619
  %v621 = vand.u32 %v620, 4294901760
  %622 = vmatpush1.msra.mxu0 %v621
  %623 = vmatprep.subr.mxu0 0.0
  %624 = vmatpush1.msra.mxu0 0.0
  %625 = vmatprep.subr.mxu0 0.0
  %626 = vmatpush1.msra.mxu0 0.0
  %627 = vmatprep.subr.mxu0 0.0
  %628 = vmatpush1.msra.mxu0 0.0
  %629 = vmatprep.subr.mxu0 0.0
  %630 = vmatpush1.msra.mxu0 0.0
  %631 = vmatprep.subr.mxu0 0.0
  %632 = vmatpush1.msra.mxu0 0.0
  %633 = vmatprep.subr.mxu0 0.0
  %634 = vmatpush1.msra.mxu0 0.0
  %635 = vmatprep.subr.mxu0 0.0
  %636 = vmatpush1.msra.mxu0 0.0
  %637 = vmatprep.subr.mxu0 0.0
  %638 = vmatpush1.msra.mxu0 0.0
  %639 = vmatprep.subr.mxu0 0.0
  %640 = vmatpush1.msra.mxu0 0.0
  %641 = vmatprep.subr.mxu0 0.0
  %642 = vmatpush1.msra.mxu0 0.0
  %643 = vmatprep.subr.mxu0 0.0
  %644 = vmatpush1.msra.mxu0 0.0
  %645 = vmatprep.subr.mxu0 0.0
  %646 = vmatpush1.msra.mxu0 0.0
  %647 = vmatprep.subr.mxu0 0.0
  %648 = vmatpush1.msra.mxu0 0.0
  %649 = vmatprep.subr.mxu0 0.0
  %650 = vmatpush1.msra.mxu0 0.0
  %651 = vmatprep.subr.mxu0 0.0
  %652 = vmatpush1.msra.mxu0 0.0
  %653 = vmatprep.subr.mxu0 0.0
  %654 = vmatpush1.msra.mxu0 0.0
  %655 = vmatprep.mubr.f32.mxu0 0.0
  %v656 = vand.u32 %v35, 4294901760
  %657 = vmatmul.mubr.f32.gmra.mrb[0].mxu0 %v656
  %v658 = vpop.f32.mrb[0].mxu0
  %v659 = vadd.f32 %v532, %v658
  %v660 = vpop.f32.mrb[0].mxu0
  %661 = vmatprep.mubr.f32.mxu0 0.0
  %v662 = vand.u32 %v36, 4294901760
  %663 = vmatmul.mubr.f32.gmra.mrb[0].mxu0 %v662
  %v664 = vpop.f32.mrb[0].mxu0
  %v665 = vadd.f32 %v540, %v664
  %v666 = vpop.f32.mrb[0].mxu0
  %667 = vdwg.mxu0
  %668 = vmatprep.subr.mxu0 0.0
  %v669 = vand.u32 %v37, 4294901760
  %670 = vmatpush1.msra.mxu0 %v669
  %671 = vmatprep.subr.mxu0 0.0
  %v672 = vand.u32 %v38, 4294901760
  %673 = vmatpush1.msra.mxu0 %v672
  %674 = vmatprep.subr.mxu0 0.0
  %v675 = vand.u32 %v39, 4294901760
  %676 = vmatpush1.msra.mxu0 %v675
  %677 = vmatprep.subr.mxu0 0.0
  %v678 = vand.u32 %v40, 4294901760
  %679 = vmatpush1.msra.mxu0 %v678
  %680 = vmatprep.subr.mxu0 0.0
  %v681 = vand.u32 %v41, 4294901760
  %682 = vmatpush1.msra.mxu0 %v681
  %683 = vmatprep.subr.mxu0 0.0
  %v684 = vand.u32 %v42, 4294901760
  %685 = vmatpush1.msra.mxu0 %v684
  %686 = vmatprep.subr.mxu0 0.0
  %v687 = vand.u32 %v43, 4294901760
  %688 = vmatpush1.msra.mxu0 %v687
  %689 = vmatprep.subr.mxu0 0.0
  %v690 = vand.u32 %v44, 4294901760
  %691 = vmatpush1.msra.mxu0 %v690
  %692 = vmatprep.subr.mxu0 0.0
  %v693 = vand.u32 %v45, 4294901760
  %694 = vmatpush1.msra.mxu0 %v693
  %695 = vmatprep.subr.mxu0 0.0
  %v696 = vand.u32 %v46, 4294901760
  %697 = vmatpush1.msra.mxu0 %v696
  %698 = vmatprep.subr.mxu0 0.0
  %v699 = vand.u32 %v47, 4294901760
  %700 = vmatpush1.msra.mxu0 %v699
  %701 = vmatprep.subr.mxu0 0.0
  %v702 = vand.u32 %v48, 4294901760
  %703 = vmatpush1.msra.mxu0 %v702
  %704 = vmatprep.subr.mxu0 0.0
  %v705 = vand.u32 %v49, 4294901760
  %706 = vmatpush1.msra.mxu0 %v705
  %707 = vmatprep.subr.mxu0 0.0
  %v708 = vand.u32 %v50, 4294901760
  %709 = vmatpush1.msra.mxu0 %v708
  %710 = vmatprep.subr.mxu0 0.0
  %v711 = vand.u32 %v51, 4294901760
  %712 = vmatpush1.msra.mxu0 %v711
  %713 = vmatprep.subr.mxu0 0.0
  %v714 = vand.u32 %v52, 4294901760
  %715 = vmatpush1.msra.mxu0 %v714
  %716 = vmatprep.subr.mxu0 0.0
  %717 = vmatpush1.msra.mxu0 0.0
  %718 = vmatprep.subr.mxu0 0.0
  %719 = vmatpush1.msra.mxu0 0.0
  %720 = vmatprep.subr.mxu0 0.0
  %721 = vmatpush1.msra.mxu0 0.0
  %722 = vmatprep.subr.mxu0 0.0
  %723 = vmatpush1.msra.mxu0 0.0
  %724 = vmatprep.subr.mxu0 0.0
  %725 = vmatpush1.msra.mxu0 0.0
  %726 = vmatprep.subr.mxu0 0.0
  %727 = vmatpush1.msra.mxu0 0.0
  %728 = vmatprep.subr.mxu0 0.0
  %729 = vmatpush1.msra.mxu0 0.0
  %730 = vmatprep.subr.mxu0 0.0
  %731 = vmatpush1.msra.mxu0 0.0
  %732 = vmatprep.subr.mxu0 0.0
  %733 = vmatpush1.msra.mxu0 0.0
  %734 = vmatprep.subr.mxu0 0.0
  %735 = vmatpush1.msra.mxu0 0.0
  %736 = vmatprep.subr.mxu0 0.0
  %737 = vmatpush1.msra.mxu0 0.0
  %738 = vmatprep.subr.mxu0 0.0
  %739 = vmatpush1.msra.mxu0 0.0
  %740 = vmatprep.subr.mxu0 0.0
  %741 = vmatpush1.msra.mxu0 0.0
  %742 = vmatprep.subr.mxu0 0.0
  %743 = vmatpush1.msra.mxu0 0.0
  %744 = vmatprep.subr.mxu0 0.0
  %745 = vmatpush1.msra.mxu0 0.0
  %746 = vmatprep.subr.mxu0 0.0
  %747 = vmatpush1.msra.mxu0 0.0
  %748 = vmatprep.mubr.f32.mxu0 0.0
  %v749 = vand.u32 %v35, 4294901760
  %750 = vmatmul.mubr.f32.gmra.mrb[0].mxu0 %v749
  %v751 = vpop.f32.mrb[0].mxu0
  %v752 = vadd.f32 %v659, %v751
  %v753 = vpop.f32.mrb[0].mxu0
  %754 = vmatprep.mubr.f32.mxu0 0.0
  %v755 = vand.u32 %v36, 4294901760
  %756 = vmatmul.mubr.f32.gmra.mrb[0].mxu0 %v755
  %v757 = vpop.f32.mrb[0].mxu0
  %v758 = vadd.f32 %v665, %v757
  %v759 = vpop.f32.mrb[0].mxu0
  %760 = vdwg.mxu0
  %v761 = vmax.f32 %v752, 0.0
  %v762 = vmax.f32 %v758, 0.0
  %v764 = vlaneseq
  %v765 = vshrl.u32 %v764, 7
  %v766 = vsub.s32 0, %v765
  %v767 = vrot.slane %v70, %v766
  %769 = vmatprep.subr.mxu0 0.0
  %v770 = vand.u32 %v54, 4294901760
  %771 = vmatpush1.msra.mxu0 %v770
  %772 = vmatprep.subr.mxu0 0.0
  %v773 = vand.u32 %v55, 4294901760
  %774 = vmatpush1.msra.mxu0 %v773
  %775 = vmatprep.subr.mxu0 0.0
  %v776 = vand.u32 %v56, 4294901760
  %777 = vmatpush1.msra.mxu0 %v776
  %778 = vmatprep.subr.mxu0 0.0
  %v779 = vand.u32 %v57, 4294901760
  %780 = vmatpush1.msra.mxu0 %v779
  %781 = vmatprep.subr.mxu0 0.0
  %v782 = vand.u32 %v58, 4294901760
  %783 = vmatpush1.msra.mxu0 %v782
  %784 = vmatprep.subr.mxu0 0.0
  %v785 = vand.u32 %v59, 4294901760
  %786 = vmatpush1.msra.mxu0 %v785
  %787 = vmatprep.subr.mxu0 0.0
  %v788 = vand.u32 %v60, 4294901760
  %789 = vmatpush1.msra.mxu0 %v788
  %790 = vmatprep.subr.mxu0 0.0
  %v791 = vand.u32 %v61, 4294901760
  %792 = vmatpush1.msra.mxu0 %v791
  %793 = vmatprep.subr.mxu0 0.0
  %v794 = vand.u32 %v62, 4294901760
  %795 = vmatpush1.msra.mxu0 %v794
  %796 = vmatprep.subr.mxu0 0.0
  %v797 = vand.u32 %v63, 4294901760
  %798 = vmatpush1.msra.mxu0 %v797
  %799 = vmatprep.subr.mxu0 0.0
  %v800 = vand.u32 %v64, 4294901760
  %801 = vmatpush1.msra.mxu0 %v800
  %802 = vmatprep.subr.mxu0 0.0
  %v803 = vand.u32 %v65, 4294901760
  %804 = vmatpush1.msra.mxu0 %v803
  %805 = vmatprep.subr.mxu0 0.0
  %v806 = vand.u32 %v66, 4294901760
  %807 = vmatpush1.msra.mxu0 %v806
  %808 = vmatprep.subr.mxu0 0.0
  %v809 = vand.u32 %v67, 4294901760
  %810 = vmatpush1.msra.mxu0 %v809
  %811 = vmatprep.subr.mxu0 0.0
  %v812 = vand.u32 %v68, 4294901760
  %813 = vmatpush1.msra.mxu0 %v812
  %814 = vmatprep.subr.mxu0 0.0
  %v815 = vand.u32 %v69, 4294901760
  %816 = vmatpush1.msra.mxu0 %v815
  %817 = vmatprep.subr.mxu0 0.0
  %818 = vmatpush1.msra.mxu0 0.0
  %819 = vmatprep.subr.mxu0 0.0
  %820 = vmatpush1.msra.mxu0 0.0
  %821 = vmatprep.subr.mxu0 0.0
  %822 = vmatpush1.msra.mxu0 0.0
  %823 = vmatprep.subr.mxu0 0.0
  %824 = vmatpush1.msra.mxu0 0.0
  %825 = vmatprep.subr.mxu0 0.0
  %826 = vmatpush1.msra.mxu0 0.0
  %827 = vmatprep.subr.mxu0 0.0
  %828 = vmatpush1.msra.mxu0 0.0
  %829 = vmatprep.subr.mxu0 0.0
  %830 = vmatpush1.msra.mxu0 0.0
  %831 = vmatprep.subr.mxu0 0.0
  %832 = vmatpush1.msra.mxu0 0.0
  %833 = vmatprep.subr.mxu0 0.0
  %834 = vmatpush1.msra.mxu0 0.0
  %835 = vmatprep.subr.mxu0 0.0
  %836 = vmatpush1.msra.mxu0 0.0
  %837 = vmatprep.subr.mxu0 0.0
  %838 = vmatpush1.msra.mxu0 0.0
  %839 = vmatprep.subr.mxu0 0.0
  %840 = vmatpush1.msra.mxu0 0.0
  %841 = vmatprep.subr.mxu0 0.0
  %842 = vmatpush1.msra.mxu0 0.0
  %843 = vmatprep.subr.mxu0 0.0
  %844 = vmatpush1.msra.mxu0 0.0
  %845 = vmatprep.subr.mxu0 0.0
  %846 = vmatpush1.msra.mxu0 0.0
  %847 = vmatprep.subr.mxu0 0.0
  %848 = vmatpush1.msra.mxu0 0.0
  %849 = vmatprep.mubr.f32.mxu0 0.0
  %v850 = vand.u32 %v761, 4294901760
  %v851 = vsub.f32 %v761, %v850
  %v852 = vand.u32 %v851, 4294901760
  %v853 = vsub.f32 %v851, %v852
  %v854 = vand.u32 %v853, 4294901760
  %855 = vmatmul.mubr.f32.gmra.mrb[0].mxu0 %v854
  %v856 = vpop.f32.mrb[0].mxu0
  %v857 = vadd.f32 %v767, %v856
  %v858 = vpop.f32.mrb[0].mxu0
  %859 = vmatprep.mubr.f32.mxu0 0.0
  %v860 = vand.u32 %v762, 4294901760
  %v861 = vsub.f32 %v762, %v860
  %v862 = vand.u32 %v861, 4294901760
  %v863 = vsub.f32 %v861, %v862
  %v864 = vand.u32 %v863, 4294901760
  %865 = vmatmul.mubr.f32.gmra.mrb[0].mxu0 %v864
  %v866 = vpop.f32.mrb[0].mxu0
  %v867 = vadd.f32 %v767, %v866
  %v868 = vpop.f32.mrb[0].mxu0
  %869 = vdwg.mxu0
  %870 = vmatprep.subr.mxu0 0.0
  %v871 = vand.u32 %v54, 4294901760
  %v872 = vsub.f32 %v54, %v871
  %v873 = vand.u32 %v872, 4294901760
  %v874 = vsub.f32 %v872, %v873
  %v875 = vand.u32 %v874, 4294901760
  %876 = vmatpush1.msra.mxu0 %v875
  %877 = vmatprep.subr.mxu0 0.0
  %v878 = vand.u32 %v55, 4294901760
  %v879 = vsub.f32 %v55, %v878
  %v880 = vand.u32 %v879, 4294901760
  %v881 = vsub.f32 %v879, %v880
  %v882 = vand.u32 %v881, 4294901760
  %883 = vmatpush1.msra.mxu0 %v882
  %884 = vmatprep.subr.mxu0 0.0
  %v885 = vand.u32 %v56, 4294901760
  %v886 = vsub.f32 %v56, %v885
  %v887 = vand.u32 %v886, 4294901760
  %v888 = vsub.f32 %v886, %v887
  %v889 = vand.u32 %v888, 4294901760
  %890 = vmatpush1.msra.mxu0 %v889
  %891 = vmatprep.subr.mxu0 0.0
  %v892 = vand.u32 %v57, 4294901760
  %v893 = vsub.f32 %v57, %v892
  %v894 = vand.u32 %v893, 4294901760
  %v895 = vsub.f32 %v893, %v894
  %v896 = vand.u32 %v895, 4294901760
  %897 = vmatpush1.msra.mxu0 %v896
  %898 = vmatprep.subr.mxu0 0.0
  %v899 = vand.u32 %v58, 4294901760
  %v900 = vsub.f32 %v58, %v899
  %v901 = vand.u32 %v900, 4294901760
  %v902 = vsub.f32 %v900, %v901
  %v903 = vand.u32 %v902, 4294901760
  %904 = vmatpush1.msra.mxu0 %v903
  %905 = vmatprep.subr.mxu0 0.0
  %v906 = vand.u32 %v59, 4294901760
  %v907 = vsub.f32 %v59, %v906
  %v908 = vand.u32 %v907, 4294901760
  %v909 = vsub.f32 %v907, %v908
  %v910 = vand.u32 %v909, 4294901760
  %911 = vmatpush1.msra.mxu0 %v910
  %912 = vmatprep.subr.mxu0 0.0
  %v913 = vand.u32 %v60, 4294901760
  %v914 = vsub.f32 %v60, %v913
  %v915 = vand.u32 %v914, 4294901760
  %v916 = vsub.f32 %v914, %v915
  %v917 = vand.u32 %v916, 4294901760
  %918 = vmatpush1.msra.mxu0 %v917
  %919 = vmatprep.subr.mxu0 0.0
  %v920 = vand.u32 %v61, 4294901760
  %v921 = vsub.f32 %v61, %v920
  %v922 = vand.u32 %v921, 4294901760
  %v923 = vsub.f32 %v921, %v922
  %v924 = vand.u32 %v923, 4294901760
  %925 = vmatpush1.msra.mxu0 %v924
  %926 = vmatprep.subr.mxu0 0.0
  %v927 = vand.u32 %v62, 4294901760
  %v928 = vsub.f32 %v62, %v927
  %v929 = vand.u32 %v928, 4294901760
  %v930 = vsub.f32 %v928, %v929
  %v931 = vand.u32 %v930, 4294901760
  %932 = vmatpush1.msra.mxu0 %v931
  %933 = vmatprep.subr.mxu0 0.0
  %v934 = vand.u32 %v63, 4294901760
  %v935 = vsub.f32 %v63, %v934
  %v936 = vand.u32 %v935, 4294901760
  %v937 = vsub.f32 %v935, %v936
  %v938 = vand.u32 %v937, 4294901760
  %939 = vmatpush1.msra.mxu0 %v938
  %940 = vmatprep.subr.mxu0 0.0
  %v941 = vand.u32 %v64, 4294901760
  %v942 = vsub.f32 %v64, %v941
  %v943 = vand.u32 %v942, 4294901760
  %v944 = vsub.f32 %v942, %v943
  %v945 = vand.u32 %v944, 4294901760
  %946 = vmatpush1.msra.mxu0 %v945
  %947 = vmatprep.subr.mxu0 0.0
  %v948 = vand.u32 %v65, 4294901760
  %v949 = vsub.f32 %v65, %v948
  %v950 = vand.u32 %v949, 4294901760
  %v951 = vsub.f32 %v949, %v950
  %v952 = vand.u32 %v951, 4294901760
  %953 = vmatpush1.msra.mxu0 %v952
  %954 = vmatprep.subr.mxu0 0.0
  %v955 = vand.u32 %v66, 4294901760
  %v956 = vsub.f32 %v66, %v955
  %v957 = vand.u32 %v956, 4294901760
  %v958 = vsub.f32 %v956, %v957
  %v959 = vand.u32 %v958, 4294901760
  %960 = vmatpush1.msra.mxu0 %v959
  %961 = vmatprep.subr.mxu0 0.0
  %v962 = vand.u32 %v67, 4294901760
  %v963 = vsub.f32 %v67, %v962
  %v964 = vand.u32 %v963, 4294901760
  %v965 = vsub.f32 %v963, %v964
  %v966 = vand.u32 %v965, 4294901760
  %967 = vmatpush1.msra.mxu0 %v966
  %968 = vmatprep.subr.mxu0 0.0
  %v969 = vand.u32 %v68, 4294901760
  %v970 = vsub.f32 %v68, %v969
  %v971 = vand.u32 %v970, 4294901760
  %v972 = vsub.f32 %v970, %v971
  %v973 = vand.u32 %v972, 4294901760
  %974 = vmatpush1.msra.mxu0 %v973
  %975 = vmatprep.subr.mxu0 0.0
  %v976 = vand.u32 %v69, 4294901760
  %v977 = vsub.f32 %v69, %v976
  %v978 = vand.u32 %v977, 4294901760
  %v979 = vsub.f32 %v977, %v978
  %v980 = vand.u32 %v979, 4294901760
  %981 = vmatpush1.msra.mxu0 %v980
  %982 = vmatprep.subr.mxu0 0.0
  %983 = vmatpush1.msra.mxu0 0.0
  %984 = vmatprep.subr.mxu0 0.0
  %985 = vmatpush1.msra.mxu0 0.0
  %986 = vmatprep.subr.mxu0 0.0
  %987 = vmatpush1.msra.mxu0 0.0
  %988 = vmatprep.subr.mxu0 0.0
  %989 = vmatpush1.msra.mxu0 0.0
  %990 = vmatprep.subr.mxu0 0.0
  %991 = vmatpush1.msra.mxu0 0.0
  %992 = vmatprep.subr.mxu0 0.0
  %993 = vmatpush1.msra.mxu0 0.0
  %994 = vmatprep.subr.mxu0 0.0
  %995 = vmatpush1.msra.mxu0 0.0
  %996 = vmatprep.subr.mxu0 0.0
  %997 = vmatpush1.msra.mxu0 0.0
  %998 = vmatprep.subr.mxu0 0.0
  %999 = vmatpush1.msra.mxu0 0.0
  %1000 = vmatprep.subr.mxu0 0.0
  %1001 = vmatpush1.msra.mxu0 0.0
  %1002 = vmatprep.subr.mxu0 0.0
  %1003 = vmatpush1.msra.mxu0 0.0
  %1004 = vmatprep.subr.mxu0 0.0
  %1005 = vmatpush1.msra.mxu0 0.0
  %1006 = vmatprep.subr.mxu0 0.0
  %1007 = vmatpush1.msra.mxu0 0.0
  %1008 = vmatprep.subr.mxu0 0.0
  %1009 = vmatpush1.msra.mxu0 0.0
  %1010 = vmatprep.subr.mxu0 0.0
  %1011 = vmatpush1.msra.mxu0 0.0
  %1012 = vmatprep.subr.mxu0 0.0
  %1013 = vmatpush1.msra.mxu0 0.0
  %1014 = vmatprep.mubr.f32.mxu0 0.0
  %v1015 = vand.u32 %v761, 4294901760
  %1016 = vmatmul.mubr.f32.gmra.mrb[0].mxu0 %v1015
  %v1017 = vpop.f32.mrb[0].mxu0
  %v1018 = vadd.f32 %v857, %v1017
  %v1019 = vpop.f32.mrb[0].mxu0
  %1020 = vmatprep.mubr.f32.mxu0 0.0
  %v1021 = vand.u32 %v762, 4294901760
  %1022 = vmatmul.mubr.f32.gmra.mrb[0].mxu0 %v1021
  %v1023 = vpop.f32.mrb[0].mxu0
  %v1024 = vadd.f32 %v867, %v1023
  %v1025 = vpop.f32.mrb[0].mxu0
  %1026 = vdwg.mxu0
  %1027 = vmatprep.subr.mxu0 0.0
  %v1028 = vand.u32 %v54, 4294901760
  %v1029 = vsub.f32 %v54, %v1028
  %1030 = vmatpush1.msra.mxu0 %v1029
  %1031 = vmatprep.subr.mxu0 0.0
  %v1032 = vand.u32 %v55, 4294901760
  %v1033 = vsub.f32 %v55, %v1032
  %1034 = vmatpush1.msra.mxu0 %v1033
  %1035 = vmatprep.subr.mxu0 0.0
  %v1036 = vand.u32 %v56, 4294901760
  %v1037 = vsub.f32 %v56, %v1036
  %1038 = vmatpush1.msra.mxu0 %v1037
  %1039 = vmatprep.subr.mxu0 0.0
  %v1040 = vand.u32 %v57, 4294901760
  %v1041 = vsub.f32 %v57, %v1040
  %1042 = vmatpush1.msra.mxu0 %v1041
  %1043 = vmatprep.subr.mxu0 0.0
  %v1044 = vand.u32 %v58, 4294901760
  %v1045 = vsub.f32 %v58, %v1044
  %1046 = vmatpush1.msra.mxu0 %v1045
  %1047 = vmatprep.subr.mxu0 0.0
  %v1048 = vand.u32 %v59, 4294901760
  %v1049 = vsub.f32 %v59, %v1048
  %1050 = vmatpush1.msra.mxu0 %v1049
  %1051 = vmatprep.subr.mxu0 0.0
  %v1052 = vand.u32 %v60, 4294901760
  %v1053 = vsub.f32 %v60, %v1052
  %1054 = vmatpush1.msra.mxu0 %v1053
  %1055 = vmatprep.subr.mxu0 0.0
  %v1056 = vand.u32 %v61, 4294901760
  %v1057 = vsub.f32 %v61, %v1056
  %1058 = vmatpush1.msra.mxu0 %v1057
  %1059 = vmatprep.subr.mxu0 0.0
  %v1060 = vand.u32 %v62, 4294901760
  %v1061 = vsub.f32 %v62, %v1060
  %1062 = vmatpush1.msra.mxu0 %v1061
  %1063 = vmatprep.subr.mxu0 0.0
  %v1064 = vand.u32 %v63, 4294901760
  %v1065 = vsub.f32 %v63, %v1064
  %1066 = vmatpush1.msra.mxu0 %v1065
  %1067 = vmatprep.subr.mxu0 0.0
  %v1068 = vand.u32 %v64, 4294901760
  %v1069 = vsub.f32 %v64, %v1068
  %1070 = vmatpush1.msra.mxu0 %v1069
  %1071 = vmatprep.subr.mxu0 0.0
  %v1072 = vand.u32 %v65, 4294901760
  %v1073 = vsub.f32 %v65, %v1072
  %1074 = vmatpush1.msra.mxu0 %v1073
  %1075 = vmatprep.subr.mxu0 0.0
  %v1076 = vand.u32 %v66, 4294901760
  %v1077 = vsub.f32 %v66, %v1076
  %1078 = vmatpush1.msra.mxu0 %v1077
  %1079 = vmatprep.subr.mxu0 0.0
  %v1080 = vand.u32 %v67, 4294901760
  %v1081 = vsub.f32 %v67, %v1080
  %1082 = vmatpush1.msra.mxu0 %v1081
  %1083 = vmatprep.subr.mxu0 0.0
  %v1084 = vand.u32 %v68, 4294901760
  %v1085 = vsub.f32 %v68, %v1084
  %1086 = vmatpush1.msra.mxu0 %v1085
  %1087 = vmatprep.subr.mxu0 0.0
  %v1088 = vand.u32 %v69, 4294901760
  %v1089 = vsub.f32 %v69, %v1088
  %1090 = vmatpush1.msra.mxu0 %v1089
  %1091 = vmatprep.subr.mxu0 0.0
  %1092 = vmatpush1.msra.mxu0 0.0
  %1093 = vmatprep.subr.mxu0 0.0
  %1094 = vmatpush1.msra.mxu0 0.0
  %1095 = vmatprep.subr.mxu0 0.0
  %1096 = vmatpush1.msra.mxu0 0.0
  %1097 = vmatprep.subr.mxu0 0.0
  %1098 = vmatpush1.msra.mxu0 0.0
  %1099 = vmatprep.subr.mxu0 0.0
  %1100 = vmatpush1.msra.mxu0 0.0
  %1101 = vmatprep.subr.mxu0 0.0
  %1102 = vmatpush1.msra.mxu0 0.0
  %1103 = vmatprep.subr.mxu0 0.0
  %1104 = vmatpush1.msra.mxu0 0.0
  %1105 = vmatprep.subr.mxu0 0.0
  %1106 = vmatpush1.msra.mxu0 0.0
  %1107 = vmatprep.subr.mxu0 0.0
  %1108 = vmatpush1.msra.mxu0 0.0
  %1109 = vmatprep.subr.mxu0 0.0
  %1110 = vmatpush1.msra.mxu0 0.0
  %1111 = vmatprep.subr.mxu0 0.0
  %1112 = vmatpush1.msra.mxu0 0.0
  %1113 = vmatprep.subr.mxu0 0.0
  %1114 = vmatpush1.msra.mxu0 0.0
  %1115 = vmatprep.subr.mxu0 0.0
  %1116 = vmatpush1.msra.mxu0 0.0
  %1117 = vmatprep.subr.mxu0 0.0
  %1118 = vmatpush1.msra.mxu0 0.0
  %1119 = vmatprep.subr.mxu0 0.0
  %1120 = vmatpush1.msra.mxu0 0.0
  %1121 = vmatprep.subr.mxu0 0.0
  %1122 = vmatpush1.msra.mxu0 0.0
  %1123 = vmatprep.mubr.f32.mxu0 0.0
  %v1124 = vand.u32 %v761, 4294901760
  %v1125 = vsub.f32 %v761, %v1124
  %1126 = vmatmul.mubr.f32.gmra.mrb[0].mxu0 %v1125
  %v1127 = vpop.f32.mrb[0].mxu0
  %v1128 = vadd.f32 %v1018, %v1127
  %v1129 = vpop.f32.mrb[0].mxu0
  %1130 = vmatprep.mubr.f32.mxu0 0.0
  %v1131 = vand.u32 %v762, 4294901760
  %v1132 = vsub.f32 %v762, %v1131
  %1133 = vmatmul.mubr.f32.gmra.mrb[0].mxu0 %v1132
  %v1134 = vpop.f32.mrb[0].mxu0
  %v1135 = vadd.f32 %v1024, %v1134
  %v1136 = vpop.f32.mrb[0].mxu0
  %1137 = vdwg.mxu0
  %1138 = vmatprep.subr.mxu0 0.0
  %v1139 = vand.u32 %v54, 4294901760
  %1140 = vmatpush1.msra.mxu0 %v1139
  %1141 = vmatprep.subr.mxu0 0.0
  %v1142 = vand.u32 %v55, 4294901760
  %1143 = vmatpush1.msra.mxu0 %v1142
  %1144 = vmatprep.subr.mxu0 0.0
  %v1145 = vand.u32 %v56, 4294901760
  %1146 = vmatpush1.msra.mxu0 %v1145
  %1147 = vmatprep.subr.mxu0 0.0
  %v1148 = vand.u32 %v57, 4294901760
  %1149 = vmatpush1.msra.mxu0 %v1148
  %1150 = vmatprep.subr.mxu0 0.0
  %v1151 = vand.u32 %v58, 4294901760
  %1152 = vmatpush1.msra.mxu0 %v1151
  %1153 = vmatprep.subr.mxu0 0.0
  %v1154 = vand.u32 %v59, 4294901760
  %1155 = vmatpush1.msra.mxu0 %v1154
  %1156 = vmatprep.subr.mxu0 0.0
  %v1157 = vand.u32 %v60, 4294901760
  %1158 = vmatpush1.msra.mxu0 %v1157
  %1159 = vmatprep.subr.mxu0 0.0
  %v1160 = vand.u32 %v61, 4294901760
  %1161 = vmatpush1.msra.mxu0 %v1160
  %1162 = vmatprep.subr.mxu0 0.0
  %v1163 = vand.u32 %v62, 4294901760
  %1164 = vmatpush1.msra.mxu0 %v1163
  %1165 = vmatprep.subr.mxu0 0.0
  %v1166 = vand.u32 %v63, 4294901760
  %1167 = vmatpush1.msra.mxu0 %v1166
  %1168 = vmatprep.subr.mxu0 0.0
  %v1169 = vand.u32 %v64, 4294901760
  %1170 = vmatpush1.msra.mxu0 %v1169
  %1171 = vmatprep.subr.mxu0 0.0
  %v1172 = vand.u32 %v65, 4294901760
  %1173 = vmatpush1.msra.mxu0 %v1172
  %1174 = vmatprep.subr.mxu0 0.0
  %v1175 = vand.u32 %v66, 4294901760
  %1176 = vmatpush1.msra.mxu0 %v1175
  %1177 = vmatprep.subr.mxu0 0.0
  %v1178 = vand.u32 %v67, 4294901760
  %1179 = vmatpush1.msra.mxu0 %v1178
  %1180 = vmatprep.subr.mxu0 0.0
  %v1181 = vand.u32 %v68, 4294901760
  %1182 = vmatpush1.msra.mxu0 %v1181
  %1183 = vmatprep.subr.mxu0 0.0
  %v1184 = vand.u32 %v69, 4294901760
  %1185 = vmatpush1.msra.mxu0 %v1184
  %1186 = vmatprep.subr.mxu0 0.0
  %1187 = vmatpush1.msra.mxu0 0.0
  %1188 = vmatprep.subr.mxu0 0.0
  %1189 = vmatpush1.msra.mxu0 0.0
  %1190 = vmatprep.subr.mxu0 0.0
  %1191 = vmatpush1.msra.mxu0 0.0
  %1192 = vmatprep.subr.mxu0 0.0
  %1193 = vmatpush1.msra.mxu0 0.0
  %1194 = vmatprep.subr.mxu0 0.0
  %1195 = vmatpush1.msra.mxu0 0.0
  %1196 = vmatprep.subr.mxu0 0.0
  %1197 = vmatpush1.msra.mxu0 0.0
  %1198 = vmatprep.subr.mxu0 0.0
  %1199 = vmatpush1.msra.mxu0 0.0
  %1200 = vmatprep.subr.mxu0 0.0
  %1201 = vmatpush1.msra.mxu0 0.0
  %1202 = vmatprep.subr.mxu0 0.0
  %1203 = vmatpush1.msra.mxu0 0.0
  %1204 = vmatprep.subr.mxu0 0.0
  %1205 = vmatpush1.msra.mxu0 0.0
  %1206 = vmatprep.subr.mxu0 0.0
  %1207 = vmatpush1.msra.mxu0 0.0
  %1208 = vmatprep.subr.mxu0 0.0
  %1209 = vmatpush1.msra.mxu0 0.0
  %1210 = vmatprep.subr.mxu0 0.0
  %1211 = vmatpush1.msra.mxu0 0.0
  %1212 = vmatprep.subr.mxu0 0.0
  %1213 = vmatpush1.msra.mxu0 0.0
  %1214 = vmatprep.subr.mxu0 0.0
  %1215 = vmatpush1.msra.mxu0 0.0
  %1216 = vmatprep.subr.mxu0 0.0
  %1217 = vmatpush1.msra.mxu0 0.0
  %1218 = vmatprep.mubr.f32.mxu0 0.0
  %v1219 = vand.u32 %v761, 4294901760
  %v1220 = vsub.f32 %v761, %v1219
  %v1221 = vand.u32 %v1220, 4294901760
  %1222 = vmatmul.mubr.f32.gmra.mrb[0].mxu0 %v1221
  %v1223 = vpop.f32.mrb[0].mxu0
  %v1224 = vadd.f32 %v1128, %v1223
  %v1225 = vpop.f32.mrb[0].mxu0
  %1226 = vmatprep.mubr.f32.mxu0 0.0
  %v1227 = vand.u32 %v762, 4294901760
  %v1228 = vsub.f32 %v762, %v1227
  %v1229 = vand.u32 %v1228, 4294901760
  %1230 = vmatmul.mubr.f32.gmra.mrb[0].mxu0 %v1229
  %v1231 = vpop.f32.mrb[0].mxu0
  %v1232 = vadd.f32 %v1135, %v1231
  %v1233 = vpop.f32.mrb[0].mxu0
  %1234 = vdwg.mxu0
  %1235 = vmatprep.subr.mxu0 0.0
  %v1236 = vand.u32 %v54, 4294901760
  %v1237 = vsub.f32 %v54, %v1236
  %v1238 = vand.u32 %v1237, 4294901760
  %1239 = vmatpush1.msra.mxu0 %v1238
  %1240 = vmatprep.subr.mxu0 0.0
  %v1241 = vand.u32 %v55, 4294901760
  %v1242 = vsub.f32 %v55, %v1241
  %v1243 = vand.u32 %v1242, 4294901760
  %1244 = vmatpush1.msra.mxu0 %v1243
  %1245 = vmatprep.subr.mxu0 0.0
  %v1246 = vand.u32 %v56, 4294901760
  %v1247 = vsub.f32 %v56, %v1246
  %v1248 = vand.u32 %v1247, 4294901760
  %1249 = vmatpush1.msra.mxu0 %v1248
  %1250 = vmatprep.subr.mxu0 0.0
  %v1251 = vand.u32 %v57, 4294901760
  %v1252 = vsub.f32 %v57, %v1251
  %v1253 = vand.u32 %v1252, 4294901760
  %1254 = vmatpush1.msra.mxu0 %v1253
  %1255 = vmatprep.subr.mxu0 0.0
  %v1256 = vand.u32 %v58, 4294901760
  %v1257 = vsub.f32 %v58, %v1256
  %v1258 = vand.u32 %v1257, 4294901760
  %1259 = vmatpush1.msra.mxu0 %v1258
  %1260 = vmatprep.subr.mxu0 0.0
  %v1261 = vand.u32 %v59, 4294901760
  %v1262 = vsub.f32 %v59, %v1261
  %v1263 = vand.u32 %v1262, 4294901760
  %1264 = vmatpush1.msra.mxu0 %v1263
  %1265 = vmatprep.subr.mxu0 0.0
  %v1266 = vand.u32 %v60, 4294901760
  %v1267 = vsub.f32 %v60, %v1266
  %v1268 = vand.u32 %v1267, 4294901760
  %1269 = vmatpush1.msra.mxu0 %v1268
  %1270 = vmatprep.subr.mxu0 0.0
  %v1271 = vand.u32 %v61, 4294901760
  %v1272 = vsub.f32 %v61, %v1271
  %v1273 = vand.u32 %v1272, 4294901760
  %1274 = vmatpush1.msra.mxu0 %v1273
  %1275 = vmatprep.subr.mxu0 0.0
  %v1276 = vand.u32 %v62, 4294901760
  %v1277 = vsub.f32 %v62, %v1276
  %v1278 = vand.u32 %v1277, 4294901760
  %1279 = vmatpush1.msra.mxu0 %v1278
  %1280 = vmatprep.subr.mxu0 0.0
  %v1281 = vand.u32 %v63, 4294901760
  %v1282 = vsub.f32 %v63, %v1281
  %v1283 = vand.u32 %v1282, 4294901760
  %1284 = vmatpush1.msra.mxu0 %v1283
  %1285 = vmatprep.subr.mxu0 0.0
  %v1286 = vand.u32 %v64, 4294901760
  %v1287 = vsub.f32 %v64, %v1286
  %v1288 = vand.u32 %v1287, 4294901760
  %1289 = vmatpush1.msra.mxu0 %v1288
  %1290 = vmatprep.subr.mxu0 0.0
  %v1291 = vand.u32 %v65, 4294901760
  %v1292 = vsub.f32 %v65, %v1291
  %v1293 = vand.u32 %v1292, 4294901760
  %1294 = vmatpush1.msra.mxu0 %v1293
  %1295 = vmatprep.subr.mxu0 0.0
  %v1296 = vand.u32 %v66, 4294901760
  %v1297 = vsub.f32 %v66, %v1296
  %v1298 = vand.u32 %v1297, 4294901760
  %1299 = vmatpush1.msra.mxu0 %v1298
  %1300 = vmatprep.subr.mxu0 0.0
  %v1301 = vand.u32 %v67, 4294901760
  %v1302 = vsub.f32 %v67, %v1301
  %v1303 = vand.u32 %v1302, 4294901760
  %1304 = vmatpush1.msra.mxu0 %v1303
  %1305 = vmatprep.subr.mxu0 0.0
  %v1306 = vand.u32 %v68, 4294901760
  %v1307 = vsub.f32 %v68, %v1306
  %v1308 = vand.u32 %v1307, 4294901760
  %1309 = vmatpush1.msra.mxu0 %v1308
  %1310 = vmatprep.subr.mxu0 0.0
  %v1311 = vand.u32 %v69, 4294901760
  %v1312 = vsub.f32 %v69, %v1311
  %v1313 = vand.u32 %v1312, 4294901760
  %1314 = vmatpush1.msra.mxu0 %v1313
  %1315 = vmatprep.subr.mxu0 0.0
  %1316 = vmatpush1.msra.mxu0 0.0
  %1317 = vmatprep.subr.mxu0 0.0
  %1318 = vmatpush1.msra.mxu0 0.0
  %1319 = vmatprep.subr.mxu0 0.0
  %1320 = vmatpush1.msra.mxu0 0.0
  %1321 = vmatprep.subr.mxu0 0.0
  %1322 = vmatpush1.msra.mxu0 0.0
  %1323 = vmatprep.subr.mxu0 0.0
  %1324 = vmatpush1.msra.mxu0 0.0
  %1325 = vmatprep.subr.mxu0 0.0
  %1326 = vmatpush1.msra.mxu0 0.0
  %1327 = vmatprep.subr.mxu0 0.0
  %1328 = vmatpush1.msra.mxu0 0.0
  %1329 = vmatprep.subr.mxu0 0.0
  %1330 = vmatpush1.msra.mxu0 0.0
  %1331 = vmatprep.subr.mxu0 0.0
  %1332 = vmatpush1.msra.mxu0 0.0
  %1333 = vmatprep.subr.mxu0 0.0
  %1334 = vmatpush1.msra.mxu0 0.0
  %1335 = vmatprep.subr.mxu0 0.0
  %1336 = vmatpush1.msra.mxu0 0.0
  %1337 = vmatprep.subr.mxu0 0.0
  %1338 = vmatpush1.msra.mxu0 0.0
  %1339 = vmatprep.subr.mxu0 0.0
  %1340 = vmatpush1.msra.mxu0 0.0
  %1341 = vmatprep.subr.mxu0 0.0
  %1342 = vmatpush1.msra.mxu0 0.0
  %1343 = vmatprep.subr.mxu0 0.0
  %1344 = vmatpush1.msra.mxu0 0.0
  %1345 = vmatprep.subr.mxu0 0.0
  %1346 = vmatpush1.msra.mxu0 0.0
  %1347 = vmatprep.mubr.f32.mxu0 0.0
  %v1348 = vand.u32 %v761, 4294901760
  %1349 = vmatmul.mubr.f32.gmra.mrb[0].mxu0 %v1348
  %v1350 = vpop.f32.mrb[0].mxu0
  %v1351 = vadd.f32 %v1224, %v1350
  %v1352 = vpop.f32.mrb[0].mxu0
  %1353 = vmatprep.mubr.f32.mxu0 0.0
  %v1354 = vand.u32 %v762, 4294901760
  %1355 = vmatmul.mubr.f32.gmra.mrb[0].mxu0 %v1354
  %v1356 = vpop.f32.mrb[0].mxu0
  %v1357 = vadd.f32 %v1232, %v1356
  %v1358 = vpop.f32.mrb[0].mxu0
  %1359 = vdwg.mxu0
  %1360 = vmatprep.subr.mxu0 0.0
  %v1361 = vand.u32 %v54, 4294901760
  %1362 = vmatpush1.msra.mxu0 %v1361
  %1363 = vmatprep.subr.mxu0 0.0
  %v1364 = vand.u32 %v55, 4294901760
  %1365 = vmatpush1.msra.mxu0 %v1364
  %1366 = vmatprep.subr.mxu0 0.0
  %v1367 = vand.u32 %v56, 4294901760
  %1368 = vmatpush1.msra.mxu0 %v1367
  %1369 = vmatprep.subr.mxu0 0.0
  %v1370 = vand.u32 %v57, 4294901760
  %1371 = vmatpush1.msra.mxu0 %v1370
  %1372 = vmatprep.subr.mxu0 0.0
  %v1373 = vand.u32 %v58, 4294901760
  %1374 = vmatpush1.msra.mxu0 %v1373
  %1375 = vmatprep.subr.mxu0 0.0
  %v1376 = vand.u32 %v59, 4294901760
  %1377 = vmatpush1.msra.mxu0 %v1376
  %1378 = vmatprep.subr.mxu0 0.0
  %v1379 = vand.u32 %v60, 4294901760
  %1380 = vmatpush1.msra.mxu0 %v1379
  %1381 = vmatprep.subr.mxu0 0.0
  %v1382 = vand.u32 %v61, 4294901760
  %1383 = vmatpush1.msra.mxu0 %v1382
  %1384 = vmatprep.subr.mxu0 0.0
  %v1385 = vand.u32 %v62, 4294901760
  %1386 = vmatpush1.msra.mxu0 %v1385
  %1387 = vmatprep.subr.mxu0 0.0
  %v1388 = vand.u32 %v63, 4294901760
  %1389 = vmatpush1.msra.mxu0 %v1388
  %1390 = vmatprep.subr.mxu0 0.0
  %v1391 = vand.u32 %v64, 4294901760
  %1392 = vmatpush1.msra.mxu0 %v1391
  %1393 = vmatprep.subr.mxu0 0.0
  %v1394 = vand.u32 %v65, 4294901760
  %1395 = vmatpush1.msra.mxu0 %v1394
  %1396 = vmatprep.subr.mxu0 0.0
  %v1397 = vand.u32 %v66, 4294901760
  %1398 = vmatpush1.msra.mxu0 %v1397
  %1399 = vmatprep.subr.mxu0 0.0
  %v1400 = vand.u32 %v67, 4294901760
  %1401 = vmatpush1.msra.mxu0 %v1400
  %1402 = vmatprep.subr.mxu0 0.0
  %v1403 = vand.u32 %v68, 4294901760
  %1404 = vmatpush1.msra.mxu0 %v1403
  %1405 = vmatprep.subr.mxu0 0.0
  %v1406 = vand.u32 %v69, 4294901760
  %1407 = vmatpush1.msra.mxu0 %v1406
  %1408 = vmatprep.subr.mxu0 0.0
  %1409 = vmatpush1.msra.mxu0 0.0
  %1410 = vmatprep.subr.mxu0 0.0
  %1411 = vmatpush1.msra.mxu0 0.0
  %1412 = vmatprep.subr.mxu0 0.0
  %1413 = vmatpush1.msra.mxu0 0.0
  %1414 = vmatprep.subr.mxu0 0.0
  %1415 = vmatpush1.msra.mxu0 0.0
  %1416 = vmatprep.subr.mxu0 0.0
  %1417 = vmatpush1.msra.mxu0 0.0
  %1418 = vmatprep.subr.mxu0 0.0
  %1419 = vmatpush1.msra.mxu0 0.0
  %1420 = vmatprep.subr.mxu0 0.0
  %1421 = vmatpush1.msra.mxu0 0.0
  %1422 = vmatprep.subr.mxu0 0.0
  %1423 = vmatpush1.msra.mxu0 0.0
  %1424 = vmatprep.subr.mxu0 0.0
  %1425 = vmatpush1.msra.mxu0 0.0
  %1426 = vmatprep.subr.mxu0 0.0
  %1427 = vmatpush1.msra.mxu0 0.0
  %1428 = vmatprep.subr.mxu0 0.0
  %1429 = vmatpush1.msra.mxu0 0.0
  %1430 = vmatprep.subr.mxu0 0.0
  %1431 = vmatpush1.msra.mxu0 0.0
  %1432 = vmatprep.subr.mxu0 0.0
  %1433 = vmatpush1.msra.mxu0 0.0
  %1434 = vmatprep.subr.mxu0 0.0
  %1435 = vmatpush1.msra.mxu0 0.0
  %1436 = vmatprep.subr.mxu0 0.0
  %1437 = vmatpush1.msra.mxu0 0.0
  %1438 = vmatprep.subr.mxu0 0.0
  %1439 = vmatpush1.msra.mxu0 0.0
  %1440 = vmatprep.mubr.f32.mxu0 0.0
  %v1441 = vand.u32 %v761, 4294901760
  %1442 = vmatmul.mubr.f32.gmra.mrb[0].mxu0 %v1441
  %v1443 = vpop.f32.mrb[0].mxu0
  %v1444 = vadd.f32 %v1351, %v1443
  %v1445 = vpop.f32.mrb[0].mxu0
  %1446 = vmatprep.mubr.f32.mxu0 0.0
  %v1447 = vand.u32 %v762, 4294901760
  %1448 = vmatmul.mubr.f32.gmra.mrb[0].mxu0 %v1447
  %v1449 = vpop.f32.mrb[0].mxu0
  %v1450 = vadd.f32 %v1357, %v1449
  %v1451 = vpop.f32.mrb[0].mxu0
  %1452 = vdwg.mxu0
  %v1453 = vld [vmem:[%s1] sm:$0xff]
  %v1454 = vld [vmem:[%s1 + $0x8] sm:$0xff]
  %v1455 = vld [vmem:[%s6] sm:$0xff]
  %v1456 = vld [vmem:[%s6 + $0x8] sm:$0xff]
  %v1457 = vld [vmem:[%s6 + $0x10] sm:$0xff]
  %v1458 = vld [vmem:[%s6 + $0x18] sm:$0xff]
  %v1459 = vld [vmem:[%s6 + $0x20] sm:$0xff]
  %v1460 = vld [vmem:[%s6 + $0x28] sm:$0xff]
  %v1461 = vld [vmem:[%s6 + $0x30] sm:$0xff]
  %v1462 = vld [vmem:[%s6 + $0x38] sm:$0xff]
  %v1463 = vld [vmem:[%s6 + $0x40] sm:$0xff]
  %v1464 = vld [vmem:[%s6 + $0x48] sm:$0xff]
  %v1465 = vld [vmem:[%s6 + $0x50] sm:$0xff]
  %v1466 = vld [vmem:[%s6 + $0x58] sm:$0xff]
  %v1467 = vld [vmem:[%s6 + $0x60] sm:$0xff]
  %v1468 = vld [vmem:[%s6 + $0x68] sm:$0xff]
  %v1469 = vld [vmem:[%s6 + $0x70] sm:$0xff]
  %v1470 = vld [vmem:[%s6 + $0x78] sm:$0xff]
  %v1471 = vld [vmem:[%s7] sm:$0x1]
  %v1472 = vld [vmem:[%s8] sm:$0xff]
  %v1473 = vld [vmem:[%s8 + $0x8] sm:$0xff]
  %v1474 = vld [vmem:[%s8 + $0x10] sm:$0xff]
  %v1475 = vld [vmem:[%s8 + $0x18] sm:$0xff]
  %v1476 = vld [vmem:[%s8 + $0x20] sm:$0xff]
  %v1477 = vld [vmem:[%s8 + $0x28] sm:$0xff]
  %v1478 = vld [vmem:[%s8 + $0x30] sm:$0xff]
  %v1479 = vld [vmem:[%s8 + $0x38] sm:$0xff]
  %v1480 = vld [vmem:[%s8 + $0x40] sm:$0xff]
  %v1481 = vld [vmem:[%s8 + $0x48] sm:$0xff]
  %v1482 = vld [vmem:[%s8 + $0x50] sm:$0xff]
  %v1483 = vld [vmem:[%s8 + $0x58] sm:$0xff]
  %v1484 = vld [vmem:[%s8 + $0x60] sm:$0xff]
  %v1485 = vld [vmem:[%s8 + $0x68] sm:$0xff]
  %v1486 = vld [vmem:[%s8 + $0x70] sm:$0xff]
  %v1487 = vld [vmem:[%s8 + $0x78] sm:$0xff]
  %v1488 = vld [vmem:[%s9] sm:$0x1]
  %v1490 = vlaneseq
  %v1491 = vshrl.u32 %v1490, 7
  %v1492 = vsub.s32 0, %v1491
  %v1493 = vrot.slane %v1471, %v1492
  %1495 = vmatprep.subr.mxu0 0.0
  %v1496 = vand.u32 %v1455, 4294901760
  %1497 = vmatpush1.msra.mxu0 %v1496
  %1498 = vmatprep.subr.mxu0 0.0
  %v1499 = vand.u32 %v1456, 4294901760
  %1500 = vmatpush1.msra.mxu0 %v1499
  %1501 = vmatprep.subr.mxu0 0.0
  %v1502 = vand.u32 %v1457, 4294901760
  %1503 = vmatpush1.msra.mxu0 %v1502
  %1504 = vmatprep.subr.mxu0 0.0
  %v1505 = vand.u32 %v1458, 4294901760
  %1506 = vmatpush1.msra.mxu0 %v1505
  %1507 = vmatprep.subr.mxu0 0.0
  %v1508 = vand.u32 %v1459, 4294901760
  %1509 = vmatpush1.msra.mxu0 %v1508
  %1510 = vmatprep.subr.mxu0 0.0
  %v1511 = vand.u32 %v1460, 4294901760
  %1512 = vmatpush1.msra.mxu0 %v1511
  %1513 = vmatprep.subr.mxu0 0.0
  %v1514 = vand.u32 %v1461, 4294901760
  %1515 = vmatpush1.msra.mxu0 %v1514
  %1516 = vmatprep.subr.mxu0 0.0
  %v1517 = vand.u32 %v1462, 4294901760
  %1518 = vmatpush1.msra.mxu0 %v1517
  %1519 = vmatprep.subr.mxu0 0.0
  %v1520 = vand.u32 %v1463, 4294901760
  %1521 = vmatpush1.msra.mxu0 %v1520
  %1522 = vmatprep.subr.mxu0 0.0
  %v1523 = vand.u32 %v1464, 4294901760
  %1524 = vmatpush1.msra.mxu0 %v1523
  %1525 = vmatprep.subr.mxu0 0.0
  %v1526 = vand.u32 %v1465, 4294901760
  %1527 = vmatpush1.msra.mxu0 %v1526
  %1528 = vmatprep.subr.mxu0 0.0
  %v1529 = vand.u32 %v1466, 4294901760
  %1530 = vmatpush1.msra.mxu0 %v1529
  %1531 = vmatprep.subr.mxu0 0.0
  %v1532 = vand.u32 %v1467, 4294901760
  %1533 = vmatpush1.msra.mxu0 %v1532
  %1534 = vmatprep.subr.mxu0 0.0
  %v1535 = vand.u32 %v1468, 4294901760
  %1536 = vmatpush1.msra.mxu0 %v1535
  %1537 = vmatprep.subr.mxu0 0.0
  %v1538 = vand.u32 %v1469, 4294901760
  %1539 = vmatpush1.msra.mxu0 %v1538
  %1540 = vmatprep.subr.mxu0 0.0
  %v1541 = vand.u32 %v1470, 4294901760
  %1542 = vmatpush1.msra.mxu0 %v1541
  %1543 = vmatprep.subr.mxu0 0.0
  %1544 = vmatpush1.msra.mxu0 0.0
  %1545 = vmatprep.subr.mxu0 0.0
  %1546 = vmatpush1.msra.mxu0 0.0
  %1547 = vmatprep.subr.mxu0 0.0
  %1548 = vmatpush1.msra.mxu0 0.0
  %1549 = vmatprep.subr.mxu0 0.0
  %1550 = vmatpush1.msra.mxu0 0.0
  %1551 = vmatprep.subr.mxu0 0.0
  %1552 = vmatpush1.msra.mxu0 0.0
  %1553 = vmatprep.subr.mxu0 0.0
  %1554 = vmatpush1.msra.mxu0 0.0
  %1555 = vmatprep.subr.mxu0 0.0
  %1556 = vmatpush1.msra.mxu0 0.0
  %1557 = vmatprep.subr.mxu0 0.0
  %1558 = vmatpush1.msra.mxu0 0.0
  %1559 = vmatprep.subr.mxu0 0.0
  %1560 = vmatpush1.msra.mxu0 0.0
  %1561 = vmatprep.subr.mxu0 0.0
  %1562 = vmatpush1.msra.mxu0 0.0
  %1563 = vmatprep.subr.mxu0 0.0
  %1564 = vmatpush1.msra.mxu0 0.0
  %1565 = vmatprep.subr.mxu0 0.0
  %1566 = vmatpush1.msra.mxu0 0.0
  %1567 = vmatprep.subr.mxu0 0.0
  %1568 = vmatpush1.msra.mxu0 0.0
  %1569 = vmatprep.subr.mxu0 0.0
  %1570 = vmatpush1.msra.mxu0 0.0
  %1571 = vmatprep.subr.mxu0 0.0
  %1572 = vmatpush1.msra.mxu0 0.0
  %1573 = vmatprep.subr.mxu0 0.0
  %1574 = vmatpush1.msra.mxu0 0.0
  %1575 = vmatprep.mubr.f32.mxu0 0.0
  %v1576 = vand.u32 %v1453, 4294901760
  %v1577 = vsub.f32 %v1453, %v1576
  %v1578 = vand.u32 %v1577, 4294901760
  %v1579 = vsub.f32 %v1577, %v1578
  %v1580 = vand.u32 %v1579, 4294901760
  %1581 = vmatmul.mubr.f32.gmra.mrb[0].mxu0 %v1580
  %v1582 = vpop.f32.mrb[0].mxu0
  %v1583 = vadd.f32 %v1493, %v1582
  %v1584 = vpop.f32.mrb[0].mxu0
  %1585 = vmatprep.mubr.f32.mxu0 0.0
  %v1586 = vand.u32 %v1454, 4294901760
  %v1587 = vsub.f32 %v1454, %v1586
  %v1588 = vand.u32 %v1587, 4294901760
  %v1589 = vsub.f32 %v1587, %v1588
  %v1590 = vand.u32 %v1589, 4294901760
  %1591 = vmatmul.mubr.f32.gmra.mrb[0].mxu0 %v1590
  %v1592 = vpop.f32.mrb[0].mxu0
  %v1593 = vadd.f32 %v1493, %v1592
  %v1594 = vpop.f32.mrb[0].mxu0
  %1595 = vdwg.mxu0
  %1596 = vmatprep.subr.mxu0 0.0
  %v1597 = vand.u32 %v1455, 4294901760
  %v1598 = vsub.f32 %v1455, %v1597
  %v1599 = vand.u32 %v1598, 4294901760
  %v1600 = vsub.f32 %v1598, %v1599
  %v1601 = vand.u32 %v1600, 4294901760
  %1602 = vmatpush1.msra.mxu0 %v1601
  %1603 = vmatprep.subr.mxu0 0.0
  %v1604 = vand.u32 %v1456, 4294901760
  %v1605 = vsub.f32 %v1456, %v1604
  %v1606 = vand.u32 %v1605, 4294901760
  %v1607 = vsub.f32 %v1605, %v1606
  %v1608 = vand.u32 %v1607, 4294901760
  %1609 = vmatpush1.msra.mxu0 %v1608
  %1610 = vmatprep.subr.mxu0 0.0
  %v1611 = vand.u32 %v1457, 4294901760
  %v1612 = vsub.f32 %v1457, %v1611
  %v1613 = vand.u32 %v1612, 4294901760
  %v1614 = vsub.f32 %v1612, %v1613
  %v1615 = vand.u32 %v1614, 4294901760
  %1616 = vmatpush1.msra.mxu0 %v1615
  %1617 = vmatprep.subr.mxu0 0.0
  %v1618 = vand.u32 %v1458, 4294901760
  %v1619 = vsub.f32 %v1458, %v1618
  %v1620 = vand.u32 %v1619, 4294901760
  %v1621 = vsub.f32 %v1619, %v1620
  %v1622 = vand.u32 %v1621, 4294901760
  %1623 = vmatpush1.msra.mxu0 %v1622
  %1624 = vmatprep.subr.mxu0 0.0
  %v1625 = vand.u32 %v1459, 4294901760
  %v1626 = vsub.f32 %v1459, %v1625
  %v1627 = vand.u32 %v1626, 4294901760
  %v1628 = vsub.f32 %v1626, %v1627
  %v1629 = vand.u32 %v1628, 4294901760
  %1630 = vmatpush1.msra.mxu0 %v1629
  %1631 = vmatprep.subr.mxu0 0.0
  %v1632 = vand.u32 %v1460, 4294901760
  %v1633 = vsub.f32 %v1460, %v1632
  %v1634 = vand.u32 %v1633, 4294901760
  %v1635 = vsub.f32 %v1633, %v1634
  %v1636 = vand.u32 %v1635, 4294901760
  %1637 = vmatpush1.msra.mxu0 %v1636
  %1638 = vmatprep.subr.mxu0 0.0
  %v1639 = vand.u32 %v1461, 4294901760
  %v1640 = vsub.f32 %v1461, %v1639
  %v1641 = vand.u32 %v1640, 4294901760
  %v1642 = vsub.f32 %v1640, %v1641
  %v1643 = vand.u32 %v1642, 4294901760
  %1644 = vmatpush1.msra.mxu0 %v1643
  %1645 = vmatprep.subr.mxu0 0.0
  %v1646 = vand.u32 %v1462, 4294901760
  %v1647 = vsub.f32 %v1462, %v1646
  %v1648 = vand.u32 %v1647, 4294901760
  %v1649 = vsub.f32 %v1647, %v1648
  %v1650 = vand.u32 %v1649, 4294901760
  %1651 = vmatpush1.msra.mxu0 %v1650
  %1652 = vmatprep.subr.mxu0 0.0
  %v1653 = vand.u32 %v1463, 4294901760
  %v1654 = vsub.f32 %v1463, %v1653
  %v1655 = vand.u32 %v1654, 4294901760
  %v1656 = vsub.f32 %v1654, %v1655
  %v1657 = vand.u32 %v1656, 4294901760
  %1658 = vmatpush1.msra.mxu0 %v1657
  %1659 = vmatprep.subr.mxu0 0.0
  %v1660 = vand.u32 %v1464, 4294901760
  %v1661 = vsub.f32 %v1464, %v1660
  %v1662 = vand.u32 %v1661, 4294901760
  %v1663 = vsub.f32 %v1661, %v1662
  %v1664 = vand.u32 %v1663, 4294901760
  %1665 = vmatpush1.msra.mxu0 %v1664
  %1666 = vmatprep.subr.mxu0 0.0
  %v1667 = vand.u32 %v1465, 4294901760
  %v1668 = vsub.f32 %v1465, %v1667
  %v1669 = vand.u32 %v1668, 4294901760
  %v1670 = vsub.f32 %v1668, %v1669
  %v1671 = vand.u32 %v1670, 4294901760
  %1672 = vmatpush1.msra.mxu0 %v1671
  %1673 = vmatprep.subr.mxu0 0.0
  %v1674 = vand.u32 %v1466, 4294901760
  %v1675 = vsub.f32 %v1466, %v1674
  %v1676 = vand.u32 %v1675, 4294901760
  %v1677 = vsub.f32 %v1675, %v1676
  %v1678 = vand.u32 %v1677, 4294901760
  %1679 = vmatpush1.msra.mxu0 %v1678
  %1680 = vmatprep.subr.mxu0 0.0
  %v1681 = vand.u32 %v1467, 4294901760
  %v1682 = vsub.f32 %v1467, %v1681
  %v1683 = vand.u32 %v1682, 4294901760
  %v1684 = vsub.f32 %v1682, %v1683
  %v1685 = vand.u32 %v1684, 4294901760
  %1686 = vmatpush1.msra.mxu0 %v1685
  %1687 = vmatprep.subr.mxu0 0.0
  %v1688 = vand.u32 %v1468, 4294901760
  %v1689 = vsub.f32 %v1468, %v1688
  %v1690 = vand.u32 %v1689, 4294901760
  %v1691 = vsub.f32 %v1689, %v1690
  %v1692 = vand.u32 %v1691, 4294901760
  %1693 = vmatpush1.msra.mxu0 %v1692
  %1694 = vmatprep.subr.mxu0 0.0
  %v1695 = vand.u32 %v1469, 4294901760
  %v1696 = vsub.f32 %v1469, %v1695
  %v1697 = vand.u32 %v1696, 4294901760
  %v1698 = vsub.f32 %v1696, %v1697
  %v1699 = vand.u32 %v1698, 4294901760
  %1700 = vmatpush1.msra.mxu0 %v1699
  %1701 = vmatprep.subr.mxu0 0.0
  %v1702 = vand.u32 %v1470, 4294901760
  %v1703 = vsub.f32 %v1470, %v1702
  %v1704 = vand.u32 %v1703, 4294901760
  %v1705 = vsub.f32 %v1703, %v1704
  %v1706 = vand.u32 %v1705, 4294901760
  %1707 = vmatpush1.msra.mxu0 %v1706
  %1708 = vmatprep.subr.mxu0 0.0
  %1709 = vmatpush1.msra.mxu0 0.0
  %1710 = vmatprep.subr.mxu0 0.0
  %1711 = vmatpush1.msra.mxu0 0.0
  %1712 = vmatprep.subr.mxu0 0.0
  %1713 = vmatpush1.msra.mxu0 0.0
  %1714 = vmatprep.subr.mxu0 0.0
  %1715 = vmatpush1.msra.mxu0 0.0
  %1716 = vmatprep.subr.mxu0 0.0
  %1717 = vmatpush1.msra.mxu0 0.0
  %1718 = vmatprep.subr.mxu0 0.0
  %1719 = vmatpush1.msra.mxu0 0.0
  %1720 = vmatprep.subr.mxu0 0.0
  %1721 = vmatpush1.msra.mxu0 0.0
  %1722 = vmatprep.subr.mxu0 0.0
  %1723 = vmatpush1.msra.mxu0 0.0
  %1724 = vmatprep.subr.mxu0 0.0
  %1725 = vmatpush1.msra.mxu0 0.0
  %1726 = vmatprep.subr.mxu0 0.0
  %1727 = vmatpush1.msra.mxu0 0.0
  %1728 = vmatprep.subr.mxu0 0.0
  %1729 = vmatpush1.msra.mxu0 0.0
  %1730 = vmatprep.subr.mxu0 0.0
  %1731 = vmatpush1.msra.mxu0 0.0
  %1732 = vmatprep.subr.mxu0 0.0
  %1733 = vmatpush1.msra.mxu0 0.0
  %1734 = vmatprep.subr.mxu0 0.0
  %1735 = vmatpush1.msra.mxu0 0.0
  %1736 = vmatprep.subr.mxu0 0.0
  %1737 = vmatpush1.msra.mxu0 0.0
  %1738 = vmatprep.subr.mxu0 0.0
  %1739 = vmatpush1.msra.mxu0 0.0
  %1740 = vmatprep.mubr.f32.mxu0 0.0
  %v1741 = vand.u32 %v1453, 4294901760
  %1742 = vmatmul.mubr.f32.gmra.mrb[0].mxu0 %v1741
  %v1743 = vpop.f32.mrb[0].mxu0
  %v1744 = vadd.f32 %v1583, %v1743
  %v1745 = vpop.f32.mrb[0].mxu0
  %1746 = vmatprep.mubr.f32.mxu0 0.0
  %v1747 = vand.u32 %v1454, 4294901760
  %1748 = vmatmul.mubr.f32.gmra.mrb[0].mxu0 %v1747
  %v1749 = vpop.f32.mrb[0].mxu0
  %v1750 = vadd.f32 %v1593, %v1749
  %v1751 = vpop.f32.mrb[0].mxu0
  %1752 = vdwg.mxu0
  %1753 = vmatprep.subr.mxu0 0.0
  %v1754 = vand.u32 %v1455, 4294901760
  %v1755 = vsub.f32 %v1455, %v1754
  %1756 = vmatpush1.msra.mxu0 %v1755
  %1757 = vmatprep.subr.mxu0 0.0
  %v1758 = vand.u32 %v1456, 4294901760
  %v1759 = vsub.f32 %v1456, %v1758
  %1760 = vmatpush1.msra.mxu0 %v1759
  %1761 = vmatprep.subr.mxu0 0.0
  %v1762 = vand.u32 %v1457, 4294901760
  %v1763 = vsub.f32 %v1457, %v1762
  %1764 = vmatpush1.msra.mxu0 %v1763
  %1765 = vmatprep.subr.mxu0 0.0
  %v1766 = vand.u32 %v1458, 4294901760
  %v1767 = vsub.f32 %v1458, %v1766
  %1768 = vmatpush1.msra.mxu0 %v1767
  %1769 = vmatprep.subr.mxu0 0.0
  %v1770 = vand.u32 %v1459, 4294901760
  %v1771 = vsub.f32 %v1459, %v1770
  %1772 = vmatpush1.msra.mxu0 %v1771
  %1773 = vmatprep.subr.mxu0 0.0
  %v1774 = vand.u32 %v1460, 4294901760
  %v1775 = vsub.f32 %v1460, %v1774
  %1776 = vmatpush1.msra.mxu0 %v1775
  %1777 = vmatprep.subr.mxu0 0.0
  %v1778 = vand.u32 %v1461, 4294901760
  %v1779 = vsub.f32 %v1461, %v1778
  %1780 = vmatpush1.msra.mxu0 %v1779
  %1781 = vmatprep.subr.mxu0 0.0
  %v1782 = vand.u32 %v1462, 4294901760
  %v1783 = vsub.f32 %v1462, %v1782
  %1784 = vmatpush1.msra.mxu0 %v1783
  %1785 = vmatprep.subr.mxu0 0.0
  %v1786 = vand.u32 %v1463, 4294901760
  %v1787 = vsub.f32 %v1463, %v1786
  %1788 = vmatpush1.msra.mxu0 %v1787
  %1789 = vmatprep.subr.mxu0 0.0
  %v1790 = vand.u32 %v1464, 4294901760
  %v1791 = vsub.f32 %v1464, %v1790
  %1792 = vmatpush1.msra.mxu0 %v1791
  %1793 = vmatprep.subr.mxu0 0.0
  %v1794 = vand.u32 %v1465, 4294901760
  %v1795 = vsub.f32 %v1465, %v1794
  %1796 = vmatpush1.msra.mxu0 %v1795
  %1797 = vmatprep.subr.mxu0 0.0
  %v1798 = vand.u32 %v1466, 4294901760
  %v1799 = vsub.f32 %v1466, %v1798
  %1800 = vmatpush1.msra.mxu0 %v1799
  %1801 = vmatprep.subr.mxu0 0.0
  %v1802 = vand.u32 %v1467, 4294901760
  %v1803 = vsub.f32 %v1467, %v1802
  %1804 = vmatpush1.msra.mxu0 %v1803
  %1805 = vmatprep.subr.mxu0 0.0
  %v1806 = vand.u32 %v1468, 4294901760
  %v1807 = vsub.f32 %v1468, %v1806
  %1808 = vmatpush1.msra.mxu0 %v1807
  %1809 = vmatprep.subr.mxu0 0.0
  %v1810 = vand.u32 %v1469, 4294901760
  %v1811 = vsub.f32 %v1469, %v1810
  %1812 = vmatpush1.msra.mxu0 %v1811
  %1813 = vmatprep.subr.mxu0 0.0
  %v1814 = vand.u32 %v1470, 4294901760
  %v1815 = vsub.f32 %v1470, %v1814
  %1816 = vmatpush1.msra.mxu0 %v1815
  %1817 = vmatprep.subr.mxu0 0.0
  %1818 = vmatpush1.msra.mxu0 0.0
  %1819 = vmatprep.subr.mxu0 0.0
  %1820 = vmatpush1.msra.mxu0 0.0
  %1821 = vmatprep.subr.mxu0 0.0
  %1822 = vmatpush1.msra.mxu0 0.0
  %1823 = vmatprep.subr.mxu0 0.0
  %1824 = vmatpush1.msra.mxu0 0.0
  %1825 = vmatprep.subr.mxu0 0.0
  %1826 = vmatpush1.msra.mxu0 0.0
  %1827 = vmatprep.subr.mxu0 0.0
  %1828 = vmatpush1.msra.mxu0 0.0
  %1829 = vmatprep.subr.mxu0 0.0
  %1830 = vmatpush1.msra.mxu0 0.0
  %1831 = vmatprep.subr.mxu0 0.0
  %1832 = vmatpush1.msra.mxu0 0.0
  %1833 = vmatprep.subr.mxu0 0.0
  %1834 = vmatpush1.msra.mxu0 0.0
  %1835 = vmatprep.subr.mxu0 0.0
  %1836 = vmatpush1.msra.mxu0 0.0
  %1837 = vmatprep.subr.mxu0 0.0
  %1838 = vmatpush1.msra.mxu0 0.0
  %1839 = vmatprep.subr.mxu0 0.0
  %1840 = vmatpush1.msra.mxu0 0.0
  %1841 = vmatprep.subr.mxu0 0.0
  %1842 = vmatpush1.msra.mxu0 0.0
  %1843 = vmatprep.subr.mxu0 0.0
  %1844 = vmatpush1.msra.mxu0 0.0
  %1845 = vmatprep.subr.mxu0 0.0
  %1846 = vmatpush1.msra.mxu0 0.0
  %1847 = vmatprep.subr.mxu0 0.0
  %1848 = vmatpush1.msra.mxu0 0.0
  %1849 = vmatprep.mubr.f32.mxu0 0.0
  %v1850 = vand.u32 %v1453, 4294901760
  %v1851 = vsub.f32 %v1453, %v1850
  %1852 = vmatmul.mubr.f32.gmra.mrb[0].mxu0 %v1851
  %v1853 = vpop.f32.mrb[0].mxu0
  %v1854 = vadd.f32 %v1744, %v1853
  %v1855 = vpop.f32.mrb[0].mxu0
  %1856 = vmatprep.mubr.f32.mxu0 0.0
  %v1857 = vand.u32 %v1454, 4294901760
  %v1858 = vsub.f32 %v1454, %v1857
  %1859 = vmatmul.mubr.f32.gmra.mrb[0].mxu0 %v1858
  %v1860 = vpop.f32.mrb[0].mxu0
  %v1861 = vadd.f32 %v1750, %v1860
  %v1862 = vpop.f32.mrb[0].mxu0
  %1863 = vdwg.mxu0
  %1864 = vmatprep.subr.mxu0 0.0
  %v1865 = vand.u32 %v1455, 4294901760
  %1866 = vmatpush1.msra.mxu0 %v1865
  %1867 = vmatprep.subr.mxu0 0.0
  %v1868 = vand.u32 %v1456, 4294901760
  %1869 = vmatpush1.msra.mxu0 %v1868
  %1870 = vmatprep.subr.mxu0 0.0
  %v1871 = vand.u32 %v1457, 4294901760
  %1872 = vmatpush1.msra.mxu0 %v1871
  %1873 = vmatprep.subr.mxu0 0.0
  %v1874 = vand.u32 %v1458, 4294901760
  %1875 = vmatpush1.msra.mxu0 %v1874
  %1876 = vmatprep.subr.mxu0 0.0
  %v1877 = vand.u32 %v1459, 4294901760
  %1878 = vmatpush1.msra.mxu0 %v1877
  %1879 = vmatprep.subr.mxu0 0.0
  %v1880 = vand.u32 %v1460, 4294901760
  %1881 = vmatpush1.msra.mxu0 %v1880
  %1882 = vmatprep.subr.mxu0 0.0
  %v1883 = vand.u32 %v1461, 4294901760
  %1884 = vmatpush1.msra.mxu0 %v1883
  %1885 = vmatprep.subr.mxu0 0.0
  %v1886 = vand.u32 %v1462, 4294901760
  %1887 = vmatpush1.msra.mxu0 %v1886
  %1888 = vmatprep.subr.mxu0 0.0
  %v1889 = vand.u32 %v1463, 4294901760
  %1890 = vmatpush1.msra.mxu0 %v1889
  %1891 = vmatprep.subr.mxu0 0.0
  %v1892 = vand.u32 %v1464, 4294901760
  %1893 = vmatpush1.msra.mxu0 %v1892
  %1894 = vmatprep.subr.mxu0 0.0
  %v1895 = vand.u32 %v1465, 4294901760
  %1896 = vmatpush1.msra.mxu0 %v1895
  %1897 = vmatprep.subr.mxu0 0.0
  %v1898 = vand.u32 %v1466, 4294901760
  %1899 = vmatpush1.msra.mxu0 %v1898
  %1900 = vmatprep.subr.mxu0 0.0
  %v1901 = vand.u32 %v1467, 4294901760
  %1902 = vmatpush1.msra.mxu0 %v1901
  %1903 = vmatprep.subr.mxu0 0.0
  %v1904 = vand.u32 %v1468, 4294901760
  %1905 = vmatpush1.msra.mxu0 %v1904
  %1906 = vmatprep.subr.mxu0 0.0
  %v1907 = vand.u32 %v1469, 4294901760
  %1908 = vmatpush1.msra.mxu0 %v1907
  %1909 = vmatprep.subr.mxu0 0.0
  %v1910 = vand.u32 %v1470, 4294901760
  %1911 = vmatpush1.msra.mxu0 %v1910
  %1912 = vmatprep.subr.mxu0 0.0
  %1913 = vmatpush1.msra.mxu0 0.0
  %1914 = vmatprep.subr.mxu0 0.0
  %1915 = vmatpush1.msra.mxu0 0.0
  %1916 = vmatprep.subr.mxu0 0.0
  %1917 = vmatpush1.msra.mxu0 0.0
  %1918 = vmatprep.subr.mxu0 0.0
  %1919 = vmatpush1.msra.mxu0 0.0
  %1920 = vmatprep.subr.mxu0 0.0
  %1921 = vmatpush1.msra.mxu0 0.0
  %1922 = vmatprep.subr.mxu0 0.0
  %1923 = vmatpush1.msra.mxu0 0.0
  %1924 = vmatprep.subr.mxu0 0.0
  %1925 = vmatpush1.msra.mxu0 0.0
  %1926 = vmatprep.subr.mxu0 0.0
  %1927 = vmatpush1.msra.mxu0 0.0
  %1928 = vmatprep.subr.mxu0 0.0
  %1929 = vmatpush1.msra.mxu0 0.0
  %1930 = vmatprep.subr.mxu0 0.0
  %1931 = vmatpush1.msra.mxu0 0.0
  %1932 = vmatprep.subr.mxu0 0.0
  %1933 = vmatpush1.msra.mxu0 0.0
  %1934 = vmatprep.subr.mxu0 0.0
  %1935 = vmatpush1.msra.mxu0 0.0
  %1936 = vmatprep.subr.mxu0 0.0
  %1937 = vmatpush1.msra.mxu0 0.0
  %1938 = vmatprep.subr.mxu0 0.0
  %1939 = vmatpush1.msra.mxu0 0.0
  %1940 = vmatprep.subr.mxu0 0.0
  %1941 = vmatpush1.msra.mxu0 0.0
  %1942 = vmatprep.subr.mxu0 0.0
  %1943 = vmatpush1.msra.mxu0 0.0
  %1944 = vmatprep.mubr.f32.mxu0 0.0
  %v1945 = vand.u32 %v1453, 4294901760
  %v1946 = vsub.f32 %v1453, %v1945
  %v1947 = vand.u32 %v1946, 4294901760
  %1948 = vmatmul.mubr.f32.gmra.mrb[0].mxu0 %v1947
  %v1949 = vpop.f32.mrb[0].mxu0
  %v1950 = vadd.f32 %v1854, %v1949
  %v1951 = vpop.f32.mrb[0].mxu0
  %1952 = vmatprep.mubr.f32.mxu0 0.0
  %v1953 = vand.u32 %v1454, 4294901760
  %v1954 = vsub.f32 %v1454, %v1953
  %v1955 = vand.u32 %v1954, 4294901760
  %1956 = vmatmul.mubr.f32.gmra.mrb[0].mxu0 %v1955
  %v1957 = vpop.f32.mrb[0].mxu0
  %v1958 = vadd.f32 %v1861, %v1957
  %v1959 = vpop.f32.mrb[0].mxu0
  %1960 = vdwg.mxu0
  %1961 = vmatprep.subr.mxu0 0.0
  %v1962 = vand.u32 %v1455, 4294901760
  %v1963 = vsub.f32 %v1455, %v1962
  %v1964 = vand.u32 %v1963, 4294901760
  %1965 = vmatpush1.msra.mxu0 %v1964
  %1966 = vmatprep.subr.mxu0 0.0
  %v1967 = vand.u32 %v1456, 4294901760
  %v1968 = vsub.f32 %v1456, %v1967
  %v1969 = vand.u32 %v1968, 4294901760
  %1970 = vmatpush1.msra.mxu0 %v1969
  %1971 = vmatprep.subr.mxu0 0.0
  %v1972 = vand.u32 %v1457, 4294901760
  %v1973 = vsub.f32 %v1457, %v1972
  %v1974 = vand.u32 %v1973, 4294901760
  %1975 = vmatpush1.msra.mxu0 %v1974
  %1976 = vmatprep.subr.mxu0 0.0
  %v1977 = vand.u32 %v1458, 4294901760
  %v1978 = vsub.f32 %v1458, %v1977
  %v1979 = vand.u32 %v1978, 4294901760
  %1980 = vmatpush1.msra.mxu0 %v1979
  %1981 = vmatprep.subr.mxu0 0.0
  %v1982 = vand.u32 %v1459, 4294901760
  %v1983 = vsub.f32 %v1459, %v1982
  %v1984 = vand.u32 %v1983, 4294901760
  %1985 = vmatpush1.msra.mxu0 %v1984
  %1986 = vmatprep.subr.mxu0 0.0
  %v1987 = vand.u32 %v1460, 4294901760
  %v1988 = vsub.f32 %v1460, %v1987
  %v1989 = vand.u32 %v1988, 4294901760
  %1990 = vmatpush1.msra.mxu0 %v1989
  %1991 = vmatprep.subr.mxu0 0.0
  %v1992 = vand.u32 %v1461, 4294901760
  %v1993 = vsub.f32 %v1461, %v1992
  %v1994 = vand.u32 %v1993, 4294901760
  %1995 = vmatpush1.msra.mxu0 %v1994
  %1996 = vmatprep.subr.mxu0 0.0
  %v1997 = vand.u32 %v1462, 4294901760
  %v1998 = vsub.f32 %v1462, %v1997
  %v1999 = vand.u32 %v1998, 4294901760
  %2000 = vmatpush1.msra.mxu0 %v1999
  %2001 = vmatprep.subr.mxu0 0.0
  %v2002 = vand.u32 %v1463, 4294901760
  %v2003 = vsub.f32 %v1463, %v2002
  %v2004 = vand.u32 %v2003, 4294901760
  %2005 = vmatpush1.msra.mxu0 %v2004
  %2006 = vmatprep.subr.mxu0 0.0
  %v2007 = vand.u32 %v1464, 4294901760
  %v2008 = vsub.f32 %v1464, %v2007
  %v2009 = vand.u32 %v2008, 4294901760
  %2010 = vmatpush1.msra.mxu0 %v2009
  %2011 = vmatprep.subr.mxu0 0.0
  %v2012 = vand.u32 %v1465, 4294901760
  %v2013 = vsub.f32 %v1465, %v2012
  %v2014 = vand.u32 %v2013, 4294901760
  %2015 = vmatpush1.msra.mxu0 %v2014
  %2016 = vmatprep.subr.mxu0 0.0
  %v2017 = vand.u32 %v1466, 4294901760
  %v2018 = vsub.f32 %v1466, %v2017
  %v2019 = vand.u32 %v2018, 4294901760
  %2020 = vmatpush1.msra.mxu0 %v2019
  %2021 = vmatprep.subr.mxu0 0.0
  %v2022 = vand.u32 %v1467, 4294901760
  %v2023 = vsub.f32 %v1467, %v2022
  %v2024 = vand.u32 %v2023, 4294901760
  %2025 = vmatpush1.msra.mxu0 %v2024
  %2026 = vmatprep.subr.mxu0 0.0
  %v2027 = vand.u32 %v1468, 4294901760
  %v2028 = vsub.f32 %v1468, %v2027
  %v2029 = vand.u32 %v2028, 4294901760
  %2030 = vmatpush1.msra.mxu0 %v2029
  %2031 = vmatprep.subr.mxu0 0.0
  %v2032 = vand.u32 %v1469, 4294901760
  %v2033 = vsub.f32 %v1469, %v2032
  %v2034 = vand.u32 %v2033, 4294901760
  %2035 = vmatpush1.msra.mxu0 %v2034
  %2036 = vmatprep.subr.mxu0 0.0
  %v2037 = vand.u32 %v1470, 4294901760
  %v2038 = vsub.f32 %v1470, %v2037
  %v2039 = vand.u32 %v2038, 4294901760
  %2040 = vmatpush1.msra.mxu0 %v2039
  %2041 = vmatprep.subr.mxu0 0.0
  %2042 = vmatpush1.msra.mxu0 0.0
  %2043 = vmatprep.subr.mxu0 0.0
  %2044 = vmatpush1.msra.mxu0 0.0
  %2045 = vmatprep.subr.mxu0 0.0
  %2046 = vmatpush1.msra.mxu0 0.0
  %2047 = vmatprep.subr.mxu0 0.0
  %2048 = vmatpush1.msra.mxu0 0.0
  %2049 = vmatprep.subr.mxu0 0.0
  %2050 = vmatpush1.msra.mxu0 0.0
  %2051 = vmatprep.subr.mxu0 0.0
  %2052 = vmatpush1.msra.mxu0 0.0
  %2053 = vmatprep.subr.mxu0 0.0
  %2054 = vmatpush1.msra.mxu0 0.0
  %2055 = vmatprep.subr.mxu0 0.0
  %2056 = vmatpush1.msra.mxu0 0.0
  %2057 = vmatprep.subr.mxu0 0.0
  %2058 = vmatpush1.msra.mxu0 0.0
  %2059 = vmatprep.subr.mxu0 0.0
  %2060 = vmatpush1.msra.mxu0 0.0
  %2061 = vmatprep.subr.mxu0 0.0
  %2062 = vmatpush1.msra.mxu0 0.0
  %2063 = vmatprep.subr.mxu0 0.0
  %2064 = vmatpush1.msra.mxu0 0.0
  %2065 = vmatprep.subr.mxu0 0.0
  %2066 = vmatpush1.msra.mxu0 0.0
  %2067 = vmatprep.subr.mxu0 0.0
  %2068 = vmatpush1.msra.mxu0 0.0
  %2069 = vmatprep.subr.mxu0 0.0
  %2070 = vmatpush1.msra.mxu0 0.0
  %2071 = vmatprep.subr.mxu0 0.0
  %2072 = vmatpush1.msra.mxu0 0.0
  %2073 = vmatprep.mubr.f32.mxu0 0.0
  %v2074 = vand.u32 %v1453, 4294901760
  %2075 = vmatmul.mubr.f32.gmra.mrb[0].mxu0 %v2074
  %v2076 = vpop.f32.mrb[0].mxu0
  %v2077 = vadd.f32 %v1950, %v2076
  %v2078 = vpop.f32.mrb[0].mxu0
  %2079 = vmatprep.mubr.f32.mxu0 0.0
  %v2080 = vand.u32 %v1454, 4294901760
  %2081 = vmatmul.mubr.f32.gmra.mrb[0].mxu0 %v2080
  %v2082 = vpop.f32.mrb[0].mxu0
  %v2083 = vadd.f32 %v1958, %v2082
  %v2084 = vpop.f32.mrb[0].mxu0
  %2085 = vdwg.mxu0
  %2086 = vmatprep.subr.mxu0 0.0
  %v2087 = vand.u32 %v1455, 4294901760
  %2088 = vmatpush1.msra.mxu0 %v2087
  %2089 = vmatprep.subr.mxu0 0.0
  %v2090 = vand.u32 %v1456, 4294901760
  %2091 = vmatpush1.msra.mxu0 %v2090
  %2092 = vmatprep.subr.mxu0 0.0
  %v2093 = vand.u32 %v1457, 4294901760
  %2094 = vmatpush1.msra.mxu0 %v2093
  %2095 = vmatprep.subr.mxu0 0.0
  %v2096 = vand.u32 %v1458, 4294901760
  %2097 = vmatpush1.msra.mxu0 %v2096
  %2098 = vmatprep.subr.mxu0 0.0
  %v2099 = vand.u32 %v1459, 4294901760
  %2100 = vmatpush1.msra.mxu0 %v2099
  %2101 = vmatprep.subr.mxu0 0.0
  %v2102 = vand.u32 %v1460, 4294901760
  %2103 = vmatpush1.msra.mxu0 %v2102
  %2104 = vmatprep.subr.mxu0 0.0
  %v2105 = vand.u32 %v1461, 4294901760
  %2106 = vmatpush1.msra.mxu0 %v2105
  %2107 = vmatprep.subr.mxu0 0.0
  %v2108 = vand.u32 %v1462, 4294901760
  %2109 = vmatpush1.msra.mxu0 %v2108
  %2110 = vmatprep.subr.mxu0 0.0
  %v2111 = vand.u32 %v1463, 4294901760
  %2112 = vmatpush1.msra.mxu0 %v2111
  %2113 = vmatprep.subr.mxu0 0.0
  %v2114 = vand.u32 %v1464, 4294901760
  %2115 = vmatpush1.msra.mxu0 %v2114
  %2116 = vmatprep.subr.mxu0 0.0
  %v2117 = vand.u32 %v1465, 4294901760
  %2118 = vmatpush1.msra.mxu0 %v2117
  %2119 = vmatprep.subr.mxu0 0.0
  %v2120 = vand.u32 %v1466, 4294901760
  %2121 = vmatpush1.msra.mxu0 %v2120
  %2122 = vmatprep.subr.mxu0 0.0
  %v2123 = vand.u32 %v1467, 4294901760
  %2124 = vmatpush1.msra.mxu0 %v2123
  %2125 = vmatprep.subr.mxu0 0.0
  %v2126 = vand.u32 %v1468, 4294901760
  %2127 = vmatpush1.msra.mxu0 %v2126
  %2128 = vmatprep.subr.mxu0 0.0
  %v2129 = vand.u32 %v1469, 4294901760
  %2130 = vmatpush1.msra.mxu0 %v2129
  %2131 = vmatprep.subr.mxu0 0.0
  %v2132 = vand.u32 %v1470, 4294901760
  %2133 = vmatpush1.msra.mxu0 %v2132
  %2134 = vmatprep.subr.mxu0 0.0
  %2135 = vmatpush1.msra.mxu0 0.0
  %2136 = vmatprep.subr.mxu0 0.0
  %2137 = vmatpush1.msra.mxu0 0.0
  %2138 = vmatprep.subr.mxu0 0.0
  %2139 = vmatpush1.msra.mxu0 0.0
  %2140 = vmatprep.subr.mxu0 0.0
  %2141 = vmatpush1.msra.mxu0 0.0
  %2142 = vmatprep.subr.mxu0 0.0
  %2143 = vmatpush1.msra.mxu0 0.0
  %2144 = vmatprep.subr.mxu0 0.0
  %2145 = vmatpush1.msra.mxu0 0.0
  %2146 = vmatprep.subr.mxu0 0.0
  %2147 = vmatpush1.msra.mxu0 0.0
  %2148 = vmatprep.subr.mxu0 0.0
  %2149 = vmatpush1.msra.mxu0 0.0
  %2150 = vmatprep.subr.mxu0 0.0
  %2151 = vmatpush1.msra.mxu0 0.0
  %2152 = vmatprep.subr.mxu0 0.0
  %2153 = vmatpush1.msra.mxu0 0.0
  %2154 = vmatprep.subr.mxu0 0.0
  %2155 = vmatpush1.msra.mxu0 0.0
  %2156 = vmatprep.subr.mxu0 0.0
  %2157 = vmatpush1.msra.mxu0 0.0
  %2158 = vmatprep.subr.mxu0 0.0
  %2159 = vmatpush1.msra.mxu0 0.0
  %2160 = vmatprep.subr.mxu0 0.0
  %2161 = vmatpush1.msra.mxu0 0.0
  %2162 = vmatprep.subr.mxu0 0.0
  %2163 = vmatpush1.msra.mxu0 0.0
  %2164 = vmatprep.subr.mxu0 0.0
  %2165 = vmatpush1.msra.mxu0 0.0
  %2166 = vmatprep.mubr.f32.mxu0 0.0
  %v2167 = vand.u32 %v1453, 4294901760
  %2168 = vmatmul.mubr.f32.gmra.mrb[0].mxu0 %v2167
  %v2169 = vpop.f32.mrb[0].mxu0
  %v2170 = vadd.f32 %v2077, %v2169
  %v2171 = vpop.f32.mrb[0].mxu0
  %2172 = vmatprep.mubr.f32.mxu0 0.0
  %v2173 = vand.u32 %v1454, 4294901760
  %2174 = vmatmul.mubr.f32.gmra.mrb[0].mxu0 %v2173
  %v2175 = vpop.f32.mrb[0].mxu0
  %v2176 = vadd.f32 %v2083, %v2175
  %v2177 = vpop.f32.mrb[0].mxu0
  %2178 = vdwg.mxu0
  %v2179 = vmax.f32 %v2170, 0.0
  %v2180 = vmax.f32 %v2176, 0.0
  %v2182 = vlaneseq
  %v2183 = vshrl.u32 %v2182, 7
  %v2184 = vsub.s32 0, %v2183
  %v2185 = vrot.slane %v1488, %v2184
  %2187 = vmatprep.subr.mxu0 0.0
  %v2188 = vand.u32 %v1472, 4294901760
  %2189 = vmatpush1.msra.mxu0 %v2188
  %2190 = vmatprep.subr.mxu0 0.0
  %v2191 = vand.u32 %v1473, 4294901760
  %2192 = vmatpush1.msra.mxu0 %v2191
  %2193 = vmatprep.subr.mxu0 0.0
  %v2194 = vand.u32 %v1474, 4294901760
  %2195 = vmatpush1.msra.mxu0 %v2194
  %2196 = vmatprep.subr.mxu0 0.0
  %v2197 = vand.u32 %v1475, 4294901760
  %2198 = vmatpush1.msra.mxu0 %v2197
  %2199 = vmatprep.subr.mxu0 0.0
  %v2200 = vand.u32 %v1476, 4294901760
  %2201 = vmatpush1.msra.mxu0 %v2200
  %2202 = vmatprep.subr.mxu0 0.0
  %v2203 = vand.u32 %v1477, 4294901760
  %2204 = vmatpush1.msra.mxu0 %v2203
  %2205 = vmatprep.subr.mxu0 0.0
  %v2206 = vand.u32 %v1478, 4294901760
  %2207 = vmatpush1.msra.mxu0 %v2206
  %2208 = vmatprep.subr.mxu0 0.0
  %v2209 = vand.u32 %v1479, 4294901760
  %2210 = vmatpush1.msra.mxu0 %v2209
  %2211 = vmatprep.subr.mxu0 0.0
  %v2212 = vand.u32 %v1480, 4294901760
  %2213 = vmatpush1.msra.mxu0 %v2212
  %2214 = vmatprep.subr.mxu0 0.0
  %v2215 = vand.u32 %v1481, 4294901760
  %2216 = vmatpush1.msra.mxu0 %v2215
  %2217 = vmatprep.subr.mxu0 0.0
  %v2218 = vand.u32 %v1482, 4294901760
  %2219 = vmatpush1.msra.mxu0 %v2218
  %2220 = vmatprep.subr.mxu0 0.0
  %v2221 = vand.u32 %v1483, 4294901760
  %2222 = vmatpush1.msra.mxu0 %v2221
  %2223 = vmatprep.subr.mxu0 0.0
  %v2224 = vand.u32 %v1484, 4294901760
  %2225 = vmatpush1.msra.mxu0 %v2224
  %2226 = vmatprep.subr.mxu0 0.0
  %v2227 = vand.u32 %v1485, 4294901760
  %2228 = vmatpush1.msra.mxu0 %v2227
  %2229 = vmatprep.subr.mxu0 0.0
  %v2230 = vand.u32 %v1486, 4294901760
  %2231 = vmatpush1.msra.mxu0 %v2230
  %2232 = vmatprep.subr.mxu0 0.0
  %v2233 = vand.u32 %v1487, 4294901760
  %2234 = vmatpush1.msra.mxu0 %v2233
  %2235 = vmatprep.subr.mxu0 0.0
  %2236 = vmatpush1.msra.mxu0 0.0
  %2237 = vmatprep.subr.mxu0 0.0
  %2238 = vmatpush1.msra.mxu0 0.0
  %2239 = vmatprep.subr.mxu0 0.0
  %2240 = vmatpush1.msra.mxu0 0.0
  %2241 = vmatprep.subr.mxu0 0.0
  %2242 = vmatpush1.msra.mxu0 0.0
  %2243 = vmatprep.subr.mxu0 0.0
  %2244 = vmatpush1.msra.mxu0 0.0
  %2245 = vmatprep.subr.mxu0 0.0
  %2246 = vmatpush1.msra.mxu0 0.0
  %2247 = vmatprep.subr.mxu0 0.0
  %2248 = vmatpush1.msra.mxu0 0.0
  %2249 = vmatprep.subr.mxu0 0.0
  %2250 = vmatpush1.msra.mxu0 0.0
  %2251 = vmatprep.subr.mxu0 0.0
  %2252 = vmatpush1.msra.mxu0 0.0
  %2253 = vmatprep.subr.mxu0 0.0
  %2254 = vmatpush1.msra.mxu0 0.0
  %2255 = vmatprep.subr.mxu0 0.0
  %2256 = vmatpush1.msra.mxu0 0.0
  %2257 = vmatprep.subr.mxu0 0.0
  %2258 = vmatpush1.msra.mxu0 0.0
  %2259 = vmatprep.subr.mxu0 0.0
  %2260 = vmatpush1.msra.mxu0 0.0
  %2261 = vmatprep.subr.mxu0 0.0
  %2262 = vmatpush1.msra.mxu0 0.0
  %2263 = vmatprep.subr.mxu0 0.0
  %2264 = vmatpush1.msra.mxu0 0.0
  %2265 = vmatprep.subr.mxu0 0.0
  %2266 = vmatpush1.msra.mxu0 0.0
  %2267 = vmatprep.mubr.f32.mxu0 0.0
  %v2268 = vand.u32 %v2179, 4294901760
  %v2269 = vsub.f32 %v2179, %v2268
  %v2270 = vand.u32 %v2269, 4294901760
  %v2271 = vsub.f32 %v2269, %v2270
  %v2272 = vand.u32 %v2271, 4294901760
  %2273 = vmatmul.mubr.f32.gmra.mrb[0].mxu0 %v2272
  %v2274 = vpop.f32.mrb[0].mxu0
  %v2275 = vadd.f32 %v2185, %v2274
  %v2276 = vpop.f32.mrb[0].mxu0
  %2277 = vmatprep.mubr.f32.mxu0 0.0
  %v2278 = vand.u32 %v2180, 4294901760
  %v2279 = vsub.f32 %v2180, %v2278
  %v2280 = vand.u32 %v2279, 4294901760
  %v2281 = vsub.f32 %v2279, %v2280
  %v2282 = vand.u32 %v2281, 4294901760
  %2283 = vmatmul.mubr.f32.gmra.mrb[0].mxu0 %v2282
  %v2284 = vpop.f32.mrb[0].mxu0
  %v2285 = vadd.f32 %v2185, %v2284
  %v2286 = vpop.f32.mrb[0].mxu0
  %2287 = vdwg.mxu0
  %2288 = vmatprep.subr.mxu0 0.0
  %v2289 = vand.u32 %v1472, 4294901760
  %v2290 = vsub.f32 %v1472, %v2289
  %v2291 = vand.u32 %v2290, 4294901760
  %v2292 = vsub.f32 %v2290, %v2291
  %v2293 = vand.u32 %v2292, 4294901760
  %2294 = vmatpush1.msra.mxu0 %v2293
  %2295 = vmatprep.subr.mxu0 0.0
  %v2296 = vand.u32 %v1473, 4294901760
  %v2297 = vsub.f32 %v1473, %v2296
  %v2298 = vand.u32 %v2297, 4294901760
  %v2299 = vsub.f32 %v2297, %v2298
  %v2300 = vand.u32 %v2299, 4294901760
  %2301 = vmatpush1.msra.mxu0 %v2300
  %2302 = vmatprep.subr.mxu0 0.0
  %v2303 = vand.u32 %v1474, 4294901760
  %v2304 = vsub.f32 %v1474, %v2303
  %v2305 = vand.u32 %v2304, 4294901760
  %v2306 = vsub.f32 %v2304, %v2305
  %v2307 = vand.u32 %v2306, 4294901760
  %2308 = vmatpush1.msra.mxu0 %v2307
  %2309 = vmatprep.subr.mxu0 0.0
  %v2310 = vand.u32 %v1475, 4294901760
  %v2311 = vsub.f32 %v1475, %v2310
  %v2312 = vand.u32 %v2311, 4294901760
  %v2313 = vsub.f32 %v2311, %v2312
  %v2314 = vand.u32 %v2313, 4294901760
  %2315 = vmatpush1.msra.mxu0 %v2314
  %2316 = vmatprep.subr.mxu0 0.0
  %v2317 = vand.u32 %v1476, 4294901760
  %v2318 = vsub.f32 %v1476, %v2317
  %v2319 = vand.u32 %v2318, 4294901760
  %v2320 = vsub.f32 %v2318, %v2319
  %v2321 = vand.u32 %v2320, 4294901760
  %2322 = vmatpush1.msra.mxu0 %v2321
  %2323 = vmatprep.subr.mxu0 0.0
  %v2324 = vand.u32 %v1477, 4294901760
  %v2325 = vsub.f32 %v1477, %v2324
  %v2326 = vand.u32 %v2325, 4294901760
  %v2327 = vsub.f32 %v2325, %v2326
  %v2328 = vand.u32 %v2327, 4294901760
  %2329 = vmatpush1.msra.mxu0 %v2328
  %2330 = vmatprep.subr.mxu0 0.0
  %v2331 = vand.u32 %v1478, 4294901760
  %v2332 = vsub.f32 %v1478, %v2331
  %v2333 = vand.u32 %v2332, 4294901760
  %v2334 = vsub.f32 %v2332, %v2333
  %v2335 = vand.u32 %v2334, 4294901760
  %2336 = vmatpush1.msra.mxu0 %v2335
  %2337 = vmatprep.subr.mxu0 0.0
  %v2338 = vand.u32 %v1479, 4294901760
  %v2339 = vsub.f32 %v1479, %v2338
  %v2340 = vand.u32 %v2339, 4294901760
  %v2341 = vsub.f32 %v2339, %v2340
  %v2342 = vand.u32 %v2341, 4294901760
  %2343 = vmatpush1.msra.mxu0 %v2342
  %2344 = vmatprep.subr.mxu0 0.0
  %v2345 = vand.u32 %v1480, 4294901760
  %v2346 = vsub.f32 %v1480, %v2345
  %v2347 = vand.u32 %v2346, 4294901760
  %v2348 = vsub.f32 %v2346, %v2347
  %v2349 = vand.u32 %v2348, 4294901760
  %2350 = vmatpush1.msra.mxu0 %v2349
  %2351 = vmatprep.subr.mxu0 0.0
  %v2352 = vand.u32 %v1481, 4294901760
  %v2353 = vsub.f32 %v1481, %v2352
  %v2354 = vand.u32 %v2353, 4294901760
  %v2355 = vsub.f32 %v2353, %v2354
  %v2356 = vand.u32 %v2355, 4294901760
  %2357 = vmatpush1.msra.mxu0 %v2356
  %2358 = vmatprep.subr.mxu0 0.0
  %v2359 = vand.u32 %v1482, 4294901760
  %v2360 = vsub.f32 %v1482, %v2359
  %v2361 = vand.u32 %v2360, 4294901760
  %v2362 = vsub.f32 %v2360, %v2361
  %v2363 = vand.u32 %v2362, 4294901760
  %2364 = vmatpush1.msra.mxu0 %v2363
  %2365 = vmatprep.subr.mxu0 0.0
  %v2366 = vand.u32 %v1483, 4294901760
  %v2367 = vsub.f32 %v1483, %v2366
  %v2368 = vand.u32 %v2367, 4294901760
  %v2369 = vsub.f32 %v2367, %v2368
  %v2370 = vand.u32 %v2369, 4294901760
  %2371 = vmatpush1.msra.mxu0 %v2370
  %2372 = vmatprep.subr.mxu0 0.0
  %v2373 = vand.u32 %v1484, 4294901760
  %v2374 = vsub.f32 %v1484, %v2373
  %v2375 = vand.u32 %v2374, 4294901760
  %v2376 = vsub.f32 %v2374, %v2375
  %v2377 = vand.u32 %v2376, 4294901760
  %2378 = vmatpush1.msra.mxu0 %v2377
  %2379 = vmatprep.subr.mxu0 0.0
  %v2380 = vand.u32 %v1485, 4294901760
  %v2381 = vsub.f32 %v1485, %v2380
  %v2382 = vand.u32 %v2381, 4294901760
  %v2383 = vsub.f32 %v2381, %v2382
  %v2384 = vand.u32 %v2383, 4294901760
  %2385 = vmatpush1.msra.mxu0 %v2384
  %2386 = vmatprep.subr.mxu0 0.0
  %v2387 = vand.u32 %v1486, 4294901760
  %v2388 = vsub.f32 %v1486, %v2387
  %v2389 = vand.u32 %v2388, 4294901760
  %v2390 = vsub.f32 %v2388, %v2389
  %v2391 = vand.u32 %v2390, 4294901760
  %2392 = vmatpush1.msra.mxu0 %v2391
  %2393 = vmatprep.subr.mxu0 0.0
  %v2394 = vand.u32 %v1487, 4294901760
  %v2395 = vsub.f32 %v1487, %v2394
  %v2396 = vand.u32 %v2395, 4294901760
  %v2397 = vsub.f32 %v2395, %v2396
  %v2398 = vand.u32 %v2397, 4294901760
  %2399 = vmatpush1.msra.mxu0 %v2398
  %2400 = vmatprep.subr.mxu0 0.0
  %2401 = vmatpush1.msra.mxu0 0.0
  %2402 = vmatprep.subr.mxu0 0.0
  %2403 = vmatpush1.msra.mxu0 0.0
  %2404 = vmatprep.subr.mxu0 0.0
  %2405 = vmatpush1.msra.mxu0 0.0
  %2406 = vmatprep.subr.mxu0 0.0
  %2407 = vmatpush1.msra.mxu0 0.0
  %2408 = vmatprep.subr.mxu0 0.0
  %2409 = vmatpush1.msra.mxu0 0.0
  %2410 = vmatprep.subr.mxu0 0.0
  %2411 = vmatpush1.msra.mxu0 0.0
  %2412 = vmatprep.subr.mxu0 0.0
  %2413 = vmatpush1.msra.mxu0 0.0
  %2414 = vmatprep.subr.mxu0 0.0
  %2415 = vmatpush1.msra.mxu0 0.0
  %2416 = vmatprep.subr.mxu0 0.0
  %2417 = vmatpush1.msra.mxu0 0.0
  %2418 = vmatprep.subr.mxu0 0.0
  %2419 = vmatpush1.msra.mxu0 0.0
  %2420 = vmatprep.subr.mxu0 0.0
  %2421 = vmatpush1.msra.mxu0 0.0
  %2422 = vmatprep.subr.mxu0 0.0
  %2423 = vmatpush1.msra.mxu0 0.0
  %2424 = vmatprep.subr.mxu0 0.0
  %2425 = vmatpush1.msra.mxu0 0.0
  %2426 = vmatprep.subr.mxu0 0.0
  %2427 = vmatpush1.msra.mxu0 0.0
  %2428 = vmatprep.subr.mxu0 0.0
  %2429 = vmatpush1.msra.mxu0 0.0
  %2430 = vmatprep.subr.mxu0 0.0
  %2431 = vmatpush1.msra.mxu0 0.0
  %2432 = vmatprep.mubr.f32.mxu0 0.0
  %v2433 = vand.u32 %v2179, 4294901760
  %2434 = vmatmul.mubr.f32.gmra.mrb[0].mxu0 %v2433
  %v2435 = vpop.f32.mrb[0].mxu0
  %v2436 = vadd.f32 %v2275, %v2435
  %v2437 = vpop.f32.mrb[0].mxu0
  %2438 = vmatprep.mubr.f32.mxu0 0.0
  %v2439 = vand.u32 %v2180, 4294901760
  %2440 = vmatmul.mubr.f32.gmra.mrb[0].mxu0 %v2439
  %v2441 = vpop.f32.mrb[0].mxu0
  %v2442 = vadd.f32 %v2285, %v2441
  %v2443 = vpop.f32.mrb[0].mxu0
  %2444 = vdwg.mxu0
  %2445 = vmatprep.subr.mxu0 0.0
  %v2446 = vand.u32 %v1472, 4294901760
  %v2447 = vsub.f32 %v1472, %v2446
  %2448 = vmatpush1.msra.mxu0 %v2447
  %2449 = vmatprep.subr.mxu0 0.0
  %v2450 = vand.u32 %v1473, 4294901760
  %v2451 = vsub.f32 %v1473, %v2450
  %2452 = vmatpush1.msra.mxu0 %v2451
  %2453 = vmatprep.subr.mxu0 0.0
  %v2454 = vand.u32 %v1474, 4294901760
  %v2455 = vsub.f32 %v1474, %v2454
  %2456 = vmatpush1.msra.mxu0 %v2455
  %2457 = vmatprep.subr.mxu0 0.0
  %v2458 = vand.u32 %v1475, 4294901760
  %v2459 = vsub.f32 %v1475, %v2458
  %2460 = vmatpush1.msra.mxu0 %v2459
  %2461 = vmatprep.subr.mxu0 0.0
  %v2462 = vand.u32 %v1476, 4294901760
  %v2463 = vsub.f32 %v1476, %v2462
  %2464 = vmatpush1.msra.mxu0 %v2463
  %2465 = vmatprep.subr.mxu0 0.0
  %v2466 = vand.u32 %v1477, 4294901760
  %v2467 = vsub.f32 %v1477, %v2466
  %2468 = vmatpush1.msra.mxu0 %v2467
  %2469 = vmatprep.subr.mxu0 0.0
  %v2470 = vand.u32 %v1478, 4294901760
  %v2471 = vsub.f32 %v1478, %v2470
  %2472 = vmatpush1.msra.mxu0 %v2471
  %2473 = vmatprep.subr.mxu0 0.0
  %v2474 = vand.u32 %v1479, 4294901760
  %v2475 = vsub.f32 %v1479, %v2474
  %2476 = vmatpush1.msra.mxu0 %v2475
  %2477 = vmatprep.subr.mxu0 0.0
  %v2478 = vand.u32 %v1480, 4294901760
  %v2479 = vsub.f32 %v1480, %v2478
  %2480 = vmatpush1.msra.mxu0 %v2479
  %2481 = vmatprep.subr.mxu0 0.0
  %v2482 = vand.u32 %v1481, 4294901760
  %v2483 = vsub.f32 %v1481, %v2482
  %2484 = vmatpush1.msra.mxu0 %v2483
  %2485 = vmatprep.subr.mxu0 0.0
  %v2486 = vand.u32 %v1482, 4294901760
  %v2487 = vsub.f32 %v1482, %v2486
  %2488 = vmatpush1.msra.mxu0 %v2487
  %2489 = vmatprep.subr.mxu0 0.0
  %v2490 = vand.u32 %v1483, 4294901760
  %v2491 = vsub.f32 %v1483, %v2490
  %2492 = vmatpush1.msra.mxu0 %v2491
  %2493 = vmatprep.subr.mxu0 0.0
  %v2494 = vand.u32 %v1484, 4294901760
  %v2495 = vsub.f32 %v1484, %v2494
  %2496 = vmatpush1.msra.mxu0 %v2495
  %2497 = vmatprep.subr.mxu0 0.0
  %v2498 = vand.u32 %v1485, 4294901760
  %v2499 = vsub.f32 %v1485, %v2498
  %2500 = vmatpush1.msra.mxu0 %v2499
  %2501 = vmatprep.subr.mxu0 0.0
  %v2502 = vand.u32 %v1486, 4294901760
  %v2503 = vsub.f32 %v1486, %v2502
  %2504 = vmatpush1.msra.mxu0 %v2503
  %2505 = vmatprep.subr.mxu0 0.0
  %v2506 = vand.u32 %v1487, 4294901760
  %v2507 = vsub.f32 %v1487, %v2506
  %2508 = vmatpush1.msra.mxu0 %v2507
  %2509 = vmatprep.subr.mxu0 0.0
  %2510 = vmatpush1.msra.mxu0 0.0
  %2511 = vmatprep.subr.mxu0 0.0
  %2512 = vmatpush1.msra.mxu0 0.0
  %2513 = vmatprep.subr.mxu0 0.0
  %2514 = vmatpush1.msra.mxu0 0.0
  %2515 = vmatprep.subr.mxu0 0.0
  %2516 = vmatpush1.msra.mxu0 0.0
  %2517 = vmatprep.subr.mxu0 0.0
  %2518 = vmatpush1.msra.mxu0 0.0
  %2519 = vmatprep.subr.mxu0 0.0
  %2520 = vmatpush1.msra.mxu0 0.0
  %2521 = vmatprep.subr.mxu0 0.0
  %2522 = vmatpush1.msra.mxu0 0.0
  %2523 = vmatprep.subr.mxu0 0.0
  %2524 = vmatpush1.msra.mxu0 0.0
  %2525 = vmatprep.subr.mxu0 0.0
  %2526 = vmatpush1.msra.mxu0 0.0
  %2527 = vmatprep.subr.mxu0 0.0
  %2528 = vmatpush1.msra.mxu0 0.0
  %2529 = vmatprep.subr.mxu0 0.0
  %2530 = vmatpush1.msra.mxu0 0.0
  %2531 = vmatprep.subr.mxu0 0.0
  %2532 = vmatpush1.msra.mxu0 0.0
  %2533 = vmatprep.subr.mxu0 0.0
  %2534 = vmatpush1.msra.mxu0 0.0
  %2535 = vmatprep.subr.mxu0 0.0
  %2536 = vmatpush1.msra.mxu0 0.0
  %2537 = vmatprep.subr.mxu0 0.0
  %2538 = vmatpush1.msra.mxu0 0.0
  %2539 = vmatprep.subr.mxu0 0.0
  %2540 = vmatpush1.msra.mxu0 0.0
  %2541 = vmatprep.mubr.f32.mxu0 0.0
  %v2542 = vand.u32 %v2179, 4294901760
  %v2543 = vsub.f32 %v2179, %v2542
  %2544 = vmatmul.mubr.f32.gmra.mrb[0].mxu0 %v2543
  %v2545 = vpop.f32.mrb[0].mxu0
  %v2546 = vadd.f32 %v2436, %v2545
  %v2547 = vpop.f32.mrb[0].mxu0
  %2548 = vmatprep.mubr.f32.mxu0 0.0
  %v2549 = vand.u32 %v2180, 4294901760
  %v2550 = vsub.f32 %v2180, %v2549
  %2551 = vmatmul.mubr.f32.gmra.mrb[0].mxu0 %v2550
  %v2552 = vpop.f32.mrb[0].mxu0
  %v2553 = vadd.f32 %v2442, %v2552
  %v2554 = vpop.f32.mrb[0].mxu0
  %2555 = vdwg.mxu0
  %2556 = vmatprep.subr.mxu0 0.0
  %v2557 = vand.u32 %v1472, 4294901760
  %2558 = vmatpush1.msra.mxu0 %v2557
  %2559 = vmatprep.subr.mxu0 0.0
  %v2560 = vand.u32 %v1473, 4294901760
  %2561 = vmatpush1.msra.mxu0 %v2560
  %2562 = vmatprep.subr.mxu0 0.0
  %v2563 = vand.u32 %v1474, 4294901760
  %2564 = vmatpush1.msra.mxu0 %v2563
  %2565 = vmatprep.subr.mxu0 0.0
  %v2566 = vand.u32 %v1475, 4294901760
  %2567 = vmatpush1.msra.mxu0 %v2566
  %2568 = vmatprep.subr.mxu0 0.0
  %v2569 = vand.u32 %v1476, 4294901760
  %2570 = vmatpush1.msra.mxu0 %v2569
  %2571 = vmatprep.subr.mxu0 0.0
  %v2572 = vand.u32 %v1477, 4294901760
  %2573 = vmatpush1.msra.mxu0 %v2572
  %2574 = vmatprep.subr.mxu0 0.0
  %v2575 = vand.u32 %v1478, 4294901760
  %2576 = vmatpush1.msra.mxu0 %v2575
  %2577 = vmatprep.subr.mxu0 0.0
  %v2578 = vand.u32 %v1479, 4294901760
  %2579 = vmatpush1.msra.mxu0 %v2578
  %2580 = vmatprep.subr.mxu0 0.0
  %v2581 = vand.u32 %v1480, 4294901760
  %2582 = vmatpush1.msra.mxu0 %v2581
  %2583 = vmatprep.subr.mxu0 0.0
  %v2584 = vand.u32 %v1481, 4294901760
  %2585 = vmatpush1.msra.mxu0 %v2584
  %2586 = vmatprep.subr.mxu0 0.0
  %v2587 = vand.u32 %v1482, 4294901760
  %2588 = vmatpush1.msra.mxu0 %v2587
  %2589 = vmatprep.subr.mxu0 0.0
  %v2590 = vand.u32 %v1483, 4294901760
  %2591 = vmatpush1.msra.mxu0 %v2590
  %2592 = vmatprep.subr.mxu0 0.0
  %v2593 = vand.u32 %v1484, 4294901760
  %2594 = vmatpush1.msra.mxu0 %v2593
  %2595 = vmatprep.subr.mxu0 0.0
  %v2596 = vand.u32 %v1485, 4294901760
  %2597 = vmatpush1.msra.mxu0 %v2596
  %2598 = vmatprep.subr.mxu0 0.0
  %v2599 = vand.u32 %v1486, 4294901760
  %2600 = vmatpush1.msra.mxu0 %v2599
  %2601 = vmatprep.subr.mxu0 0.0
  %v2602 = vand.u32 %v1487, 4294901760
  %2603 = vmatpush1.msra.mxu0 %v2602
  %2604 = vmatprep.subr.mxu0 0.0
  %2605 = vmatpush1.msra.mxu0 0.0
  %2606 = vmatprep.subr.mxu0 0.0
  %2607 = vmatpush1.msra.mxu0 0.0
  %2608 = vmatprep.subr.mxu0 0.0
  %2609 = vmatpush1.msra.mxu0 0.0
  %2610 = vmatprep.subr.mxu0 0.0
  %2611 = vmatpush1.msra.mxu0 0.0
  %2612 = vmatprep.subr.mxu0 0.0
  %2613 = vmatpush1.msra.mxu0 0.0
  %2614 = vmatprep.subr.mxu0 0.0
  %2615 = vmatpush1.msra.mxu0 0.0
  %2616 = vmatprep.subr.mxu0 0.0
  %2617 = vmatpush1.msra.mxu0 0.0
  %2618 = vmatprep.subr.mxu0 0.0
  %2619 = vmatpush1.msra.mxu0 0.0
  %2620 = vmatprep.subr.mxu0 0.0
  %2621 = vmatpush1.msra.mxu0 0.0
  %2622 = vmatprep.subr.mxu0 0.0
  %2623 = vmatpush1.msra.mxu0 0.0
  %2624 = vmatprep.subr.mxu0 0.0
  %2625 = vmatpush1.msra.mxu0 0.0
  %2626 = vmatprep.subr.mxu0 0.0
  %2627 = vmatpush1.msra.mxu0 0.0
  %2628 = vmatprep.subr.mxu0 0.0
  %2629 = vmatpush1.msra.mxu0 0.0
  %2630 = vmatprep.subr.mxu0 0.0
  %2631 = vmatpush1.msra.mxu0 0.0
  %2632 = vmatprep.subr.mxu0 0.0
  %2633 = vmatpush1.msra.mxu0 0.0
  %2634 = vmatprep.subr.mxu0 0.0
  %2635 = vmatpush1.msra.mxu0 0.0
  %2636 = vmatprep.mubr.f32.mxu0 0.0
  %v2637 = vand.u32 %v2179, 4294901760
  %v2638 = vsub.f32 %v2179, %v2637
  %v2639 = vand.u32 %v2638, 4294901760
  %2640 = vmatmul.mubr.f32.gmra.mrb[0].mxu0 %v2639
  %v2641 = vpop.f32.mrb[0].mxu0
  %v2642 = vadd.f32 %v2546, %v2641
  %v2643 = vpop.f32.mrb[0].mxu0
  %2644 = vmatprep.mubr.f32.mxu0 0.0
  %v2645 = vand.u32 %v2180, 4294901760
  %v2646 = vsub.f32 %v2180, %v2645
  %v2647 = vand.u32 %v2646, 4294901760
  %2648 = vmatmul.mubr.f32.gmra.mrb[0].mxu0 %v2647
  %v2649 = vpop.f32.mrb[0].mxu0
  %v2650 = vadd.f32 %v2553, %v2649
  %v2651 = vpop.f32.mrb[0].mxu0
  %2652 = vdwg.mxu0
  %2653 = vmatprep.subr.mxu0 0.0
  %v2654 = vand.u32 %v1472, 4294901760
  %v2655 = vsub.f32 %v1472, %v2654
  %v2656 = vand.u32 %v2655, 4294901760
  %2657 = vmatpush1.msra.mxu0 %v2656
  %2658 = vmatprep.subr.mxu0 0.0
  %v2659 = vand.u32 %v1473, 4294901760
  %v2660 = vsub.f32 %v1473, %v2659
  %v2661 = vand.u32 %v2660, 4294901760
  %2662 = vmatpush1.msra.mxu0 %v2661
  %2663 = vmatprep.subr.mxu0 0.0
  %v2664 = vand.u32 %v1474, 4294901760
  %v2665 = vsub.f32 %v1474, %v2664
  %v2666 = vand.u32 %v2665, 4294901760
  %2667 = vmatpush1.msra.mxu0 %v2666
  %2668 = vmatprep.subr.mxu0 0.0
  %v2669 = vand.u32 %v1475, 4294901760
  %v2670 = vsub.f32 %v1475, %v2669
  %v2671 = vand.u32 %v2670, 4294901760
  %2672 = vmatpush1.msra.mxu0 %v2671
  %2673 = vmatprep.subr.mxu0 0.0
  %v2674 = vand.u32 %v1476, 4294901760
  %v2675 = vsub.f32 %v1476, %v2674
  %v2676 = vand.u32 %v2675, 4294901760
  %2677 = vmatpush1.msra.mxu0 %v2676
  %2678 = vmatprep.subr.mxu0 0.0
  %v2679 = vand.u32 %v1477, 4294901760
  %v2680 = vsub.f32 %v1477, %v2679
  %v2681 = vand.u32 %v2680, 4294901760
  %2682 = vmatpush1.msra.mxu0 %v2681
  %2683 = vmatprep.subr.mxu0 0.0
  %v2684 = vand.u32 %v1478, 4294901760
  %v2685 = vsub.f32 %v1478, %v2684
  %v2686 = vand.u32 %v2685, 4294901760
  %2687 = vmatpush1.msra.mxu0 %v2686
  %2688 = vmatprep.subr.mxu0 0.0
  %v2689 = vand.u32 %v1479, 4294901760
  %v2690 = vsub.f32 %v1479, %v2689
  %v2691 = vand.u32 %v2690, 4294901760
  %2692 = vmatpush1.msra.mxu0 %v2691
  %2693 = vmatprep.subr.mxu0 0.0
  %v2694 = vand.u32 %v1480, 4294901760
  %v2695 = vsub.f32 %v1480, %v2694
  %v2696 = vand.u32 %v2695, 4294901760
  %2697 = vmatpush1.msra.mxu0 %v2696
  %2698 = vmatprep.subr.mxu0 0.0
  %v2699 = vand.u32 %v1481, 4294901760
  %v2700 = vsub.f32 %v1481, %v2699
  %v2701 = vand.u32 %v2700, 4294901760
  %2702 = vmatpush1.msra.mxu0 %v2701
  %2703 = vmatprep.subr.mxu0 0.0
  %v2704 = vand.u32 %v1482, 4294901760
  %v2705 = vsub.f32 %v1482, %v2704
  %v2706 = vand.u32 %v2705, 4294901760
  %2707 = vmatpush1.msra.mxu0 %v2706
  %2708 = vmatprep.subr.mxu0 0.0
  %v2709 = vand.u32 %v1483, 4294901760
  %v2710 = vsub.f32 %v1483, %v2709
  %v2711 = vand.u32 %v2710, 4294901760
  %2712 = vmatpush1.msra.mxu0 %v2711
  %2713 = vmatprep.subr.mxu0 0.0
  %v2714 = vand.u32 %v1484, 4294901760
  %v2715 = vsub.f32 %v1484, %v2714
  %v2716 = vand.u32 %v2715, 4294901760
  %2717 = vmatpush1.msra.mxu0 %v2716
  %2718 = vmatprep.subr.mxu0 0.0
  %v2719 = vand.u32 %v1485, 4294901760
  %v2720 = vsub.f32 %v1485, %v2719
  %v2721 = vand.u32 %v2720, 4294901760
  %2722 = vmatpush1.msra.mxu0 %v2721
  %2723 = vmatprep.subr.mxu0 0.0
  %v2724 = vand.u32 %v1486, 4294901760
  %v2725 = vsub.f32 %v1486, %v2724
  %v2726 = vand.u32 %v2725, 4294901760
  %2727 = vmatpush1.msra.mxu0 %v2726
  %2728 = vmatprep.subr.mxu0 0.0
  %v2729 = vand.u32 %v1487, 4294901760
  %v2730 = vsub.f32 %v1487, %v2729
  %v2731 = vand.u32 %v2730, 4294901760
  %2732 = vmatpush1.msra.mxu0 %v2731
  %2733 = vmatprep.subr.mxu0 0.0
  %2734 = vmatpush1.msra.mxu0 0.0
  %2735 = vmatprep.subr.mxu0 0.0
  %2736 = vmatpush1.msra.mxu0 0.0
  %2737 = vmatprep.subr.mxu0 0.0
  %2738 = vmatpush1.msra.mxu0 0.0
  %2739 = vmatprep.subr.mxu0 0.0
  %2740 = vmatpush1.msra.mxu0 0.0
  %2741 = vmatprep.subr.mxu0 0.0
  %2742 = vmatpush1.msra.mxu0 0.0
  %2743 = vmatprep.subr.mxu0 0.0
  %2744 = vmatpush1.msra.mxu0 0.0
  %2745 = vmatprep.subr.mxu0 0.0
  %2746 = vmatpush1.msra.mxu0 0.0
  %2747 = vmatprep.subr.mxu0 0.0
  %2748 = vmatpush1.msra.mxu0 0.0
  %2749 = vmatprep.subr.mxu0 0.0
  %2750 = vmatpush1.msra.mxu0 0.0
  %2751 = vmatprep.subr.mxu0 0.0
  %2752 = vmatpush1.msra.mxu0 0.0
  %2753 = vmatprep.subr.mxu0 0.0
  %2754 = vmatpush1.msra.mxu0 0.0
  %2755 = vmatprep.subr.mxu0 0.0
  %2756 = vmatpush1.msra.mxu0 0.0
  %2757 = vmatprep.subr.mxu0 0.0
  %2758 = vmatpush1.msra.mxu0 0.0
  %2759 = vmatprep.subr.mxu0 0.0
  %2760 = vmatpush1.msra.mxu0 0.0
  %2761 = vmatprep.subr.mxu0 0.0
  %2762 = vmatpush1.msra.mxu0 0.0
  %2763 = vmatprep.subr.mxu0 0.0
  %2764 = vmatpush1.msra.mxu0 0.0
  %2765 = vmatprep.mubr.f32.mxu0 0.0
  %v2766 = vand.u32 %v2179, 4294901760
  %2767 = vmatmul.mubr.f32.gmra.mrb[0].mxu0 %v2766
  %v2768 = vpop.f32.mrb[0].mxu0
  %v2769 = vadd.f32 %v2642, %v2768
  %v2770 = vpop.f32.mrb[0].mxu0
  %2771 = vmatprep.mubr.f32.mxu0 0.0
  %v2772 = vand.u32 %v2180, 4294901760
  %2773 = vmatmul.mubr.f32.gmra.mrb[0].mxu0 %v2772
  %v2774 = vpop.f32.mrb[0].mxu0
  %v2775 = vadd.f32 %v2650, %v2774
  %v2776 = vpop.f32.mrb[0].mxu0
  %2777 = vdwg.mxu0
  %2778 = vmatprep.subr.mxu0 0.0
  %v2779 = vand.u32 %v1472, 4294901760
  %2780 = vmatpush1.msra.mxu0 %v2779
  %2781 = vmatprep.subr.mxu0 0.0
  %v2782 = vand.u32 %v1473, 4294901760
  %2783 = vmatpush1.msra.mxu0 %v2782
  %2784 = vmatprep.subr.mxu0 0.0
  %v2785 = vand.u32 %v1474, 4294901760
  %2786 = vmatpush1.msra.mxu0 %v2785
  %2787 = vmatprep.subr.mxu0 0.0
  %v2788 = vand.u32 %v1475, 4294901760
  %2789 = vmatpush1.msra.mxu0 %v2788
  %2790 = vmatprep.subr.mxu0 0.0
  %v2791 = vand.u32 %v1476, 4294901760
  %2792 = vmatpush1.msra.mxu0 %v2791
  %2793 = vmatprep.subr.mxu0 0.0
  %v2794 = vand.u32 %v1477, 4294901760
  %2795 = vmatpush1.msra.mxu0 %v2794
  %2796 = vmatprep.subr.mxu0 0.0
  %v2797 = vand.u32 %v1478, 4294901760
  %2798 = vmatpush1.msra.mxu0 %v2797
  %2799 = vmatprep.subr.mxu0 0.0
  %v2800 = vand.u32 %v1479, 4294901760
  %2801 = vmatpush1.msra.mxu0 %v2800
  %2802 = vmatprep.subr.mxu0 0.0
  %v2803 = vand.u32 %v1480, 4294901760
  %2804 = vmatpush1.msra.mxu0 %v2803
  %2805 = vmatprep.subr.mxu0 0.0
  %v2806 = vand.u32 %v1481, 4294901760
  %2807 = vmatpush1.msra.mxu0 %v2806
  %2808 = vmatprep.subr.mxu0 0.0
  %v2809 = vand.u32 %v1482, 4294901760
  %2810 = vmatpush1.msra.mxu0 %v2809
  %2811 = vmatprep.subr.mxu0 0.0
  %v2812 = vand.u32 %v1483, 4294901760
  %2813 = vmatpush1.msra.mxu0 %v2812
  %2814 = vmatprep.subr.mxu0 0.0
  %v2815 = vand.u32 %v1484, 4294901760
  %2816 = vmatpush1.msra.mxu0 %v2815
  %2817 = vmatprep.subr.mxu0 0.0
  %v2818 = vand.u32 %v1485, 4294901760
  %2819 = vmatpush1.msra.mxu0 %v2818
  %2820 = vmatprep.subr.mxu0 0.0
  %v2821 = vand.u32 %v1486, 4294901760
  %2822 = vmatpush1.msra.mxu0 %v2821
  %2823 = vmatprep.subr.mxu0 0.0
  %v2824 = vand.u32 %v1487, 4294901760
  %2825 = vmatpush1.msra.mxu0 %v2824
  %2826 = vmatprep.subr.mxu0 0.0
  %2827 = vmatpush1.msra.mxu0 0.0
  %2828 = vmatprep.subr.mxu0 0.0
  %2829 = vmatpush1.msra.mxu0 0.0
  %2830 = vmatprep.subr.mxu0 0.0
  %2831 = vmatpush1.msra.mxu0 0.0
  %2832 = vmatprep.subr.mxu0 0.0
  %2833 = vmatpush1.msra.mxu0 0.0
  %2834 = vmatprep.subr.mxu0 0.0
  %2835 = vmatpush1.msra.mxu0 0.0
  %2836 = vmatprep.subr.mxu0 0.0
  %2837 = vmatpush1.msra.mxu0 0.0
  %2838 = vmatprep.subr.mxu0 0.0
  %2839 = vmatpush1.msra.mxu0 0.0
  %2840 = vmatprep.subr.mxu0 0.0
  %2841 = vmatpush1.msra.mxu0 0.0
  %2842 = vmatprep.subr.mxu0 0.0
  %2843 = vmatpush1.msra.mxu0 0.0
  %2844 = vmatprep.subr.mxu0 0.0
  %2845 = vmatpush1.msra.mxu0 0.0
  %2846 = vmatprep.subr.mxu0 0.0
  %2847 = vmatpush1.msra.mxu0 0.0
  %2848 = vmatprep.subr.mxu0 0.0
  %2849 = vmatpush1.msra.mxu0 0.0
  %2850 = vmatprep.subr.mxu0 0.0
  %2851 = vmatpush1.msra.mxu0 0.0
  %2852 = vmatprep.subr.mxu0 0.0
  %2853 = vmatpush1.msra.mxu0 0.0
  %2854 = vmatprep.subr.mxu0 0.0
  %2855 = vmatpush1.msra.mxu0 0.0
  %2856 = vmatprep.subr.mxu0 0.0
  %2857 = vmatpush1.msra.mxu0 0.0
  %2858 = vmatprep.mubr.f32.mxu0 0.0
  %v2859 = vand.u32 %v2179, 4294901760
  %2860 = vmatmul.mubr.f32.gmra.mrb[0].mxu0 %v2859
  %v2861 = vpop.f32.mrb[0].mxu0
  %v2862 = vadd.f32 %v2769, %v2861
  %v2863 = vpop.f32.mrb[0].mxu0
  %2864 = vmatprep.mubr.f32.mxu0 0.0
  %v2865 = vand.u32 %v2180, 4294901760
  %2866 = vmatmul.mubr.f32.gmra.mrb[0].mxu0 %v2865
  %v2867 = vpop.f32.mrb[0].mxu0
  %v2868 = vadd.f32 %v2775, %v2867
  %v2869 = vpop.f32.mrb[0].mxu0
  %2870 = vdwg.mxu0
  %v2871 = vmul.f32 %v1444, %v2862
  %v2872 = vmul.f32 %v1450, %v2868
  %2873 = vadd.xlane.f32.xlu0 %v2871
  %v2874 = vpop.xlane.xlu0 %2873
  %2875 = vadd.xlane.f32.xlu0 %v2872
  %v2876 = vpop.xlane.xlu0 %2875
  %v2877 = vmul.f32 %v1444, %v1444
  %v2878 = vmul.f32 %v1450, %v1450
  %2879 = vadd.xlane.f32.xlu0 %v2877
  %v2880 = vpop.xlane.xlu0 %2879
  %2881 = vadd.xlane.f32.xlu0 %v2878
  %v2882 = vpop.xlane.xlu0 %2881
  %v2883 = vmul.f32 %v2862, %v2862
  %v2884 = vmul.f32 %v2868, %v2868
  %2885 = vadd.xlane.f32.xlu0 %v2883
  %v2886 = vpop.xlane.xlu0 %2885
  %2887 = vadd.xlane.f32.xlu0 %v2884
  %v2888 = vpop.xlane.xlu0 %2887
  %v2889 = vmax.f32 %v2880, 1e-24
  %v2890 = vmax.f32 %v2882, 1e-24
  %v2891 = vrsqrt.pop %v2889
  %v2892 = vrsqrt.pop %v2890
  %v2893 = vmul.f32 %v2874, %v2891
  %v2894 = vmul.f32 %v2876, %v2892
  %v2895 = vmax.f32 %v2886, 1e-24
  %v2896 = vmax.f32 %v2888, 1e-24
  %v2897 = vrsqrt.pop %v2895
  %v2898 = vrsqrt.pop %v2896
  %v2899 = vmul.f32 %v2893, %v2897
  %v2900 = vmul.f32 %v2894, %v2898
  %vm2901 = vcmask 7168
  %2902 = vst.msk [vmem:[%s10] sm:$0xff] %vm2901, %v2899
  %2903 = vst.msk [vmem:[%s10 + $0x8] sm:$0xff] %vm2901, %v2900
  // Predicated region
  $region42: #{matching_forward.1} parent=0 // pred_check
    _
  $region43: #{matching_forward.1} parent=0 // pred_check_branch
    %2905 = sbr.rel (0) target = $region45
  $region44: #{matching_forward.1} parent=0 // pred_region
    _
  $region45: #{matching_forward.1} parent=0 // pred_fallthru
    _
  // Predicated region
  $region46: #{matching_forward.1} parent=0 // pred_check
    _
  $region47: #{matching_forward.1} parent=0 // pred_check_branch
    %2907 = sbr.rel (0) target = $region49
  $region48: #{matching_forward.1} parent=0 // pred_region
    _
  $region49: #{matching_forward.1} parent=0 // pred_fallthru
    _

</llo_original>
